<compile_context>
chip_gen: v7x
topology: tpu7x:2x2x1
jax: 0.10.0
libtpu: 0.0.40
codegen_flags: <defaults>
</compile_context>

<pallas_src>
import functools

import jax
import jax.numpy as jnp
from jax.experimental import pallas as pl
from jax.experimental.pallas import tpu as pltpu


def _layer_norm(y, gamma, beta, eps):
    mu = jnp.mean(y, axis=-1, keepdims=True)
    var = jnp.mean((y - mu) ** 2, axis=-1, keepdims=True)
    return (y - mu) * jax.lax.rsqrt(var + eps) * gamma + beta


def encoder_layer_kernel(S, n_head, eps, matmul_dtype,
                         # scalar-prefetch (SMEM)
                         lens_ref,
                         # blocked activations + resident weights
                         x_ref,
                         wqkv_ref, bqkv_ref, wo_ref, bo_ref,
                         g1_ref, be1_ref,
                         w1_ref, bf1_ref, w2_ref, bf2_ref,
                         g2_ref, be2_ref,
                         out_ref):
    b = pl.program_id(0)
    x = x_ref[0].astype(jnp.float32)                 # (S, D)
    D = x.shape[-1]
    dh = D // n_head

    xm = x.astype(matmul_dtype)

    # ---- Fused Q/K/V projection: single MXU pass with N = 3*D (weights already bf16) ----
    qkv = jnp.dot(xm, wqkv_ref[...],
                  preferred_element_type=jnp.float32) + bqkv_ref[...]   # (S, 3D) f32
    q, k, v = qkv[:, :D], qkv[:, D:2 * D], qkv[:, 2 * D:]

    def heads(t):
        # (S, D) -> (n_head, S, dh).  Columns are already head-major, so this is a
        # reshape plus a head<->row relayout (tile-granular when dh is a lane multiple).
        return t.reshape(S, n_head, dh).transpose(1, 0, 2).astype(matmul_dtype)

    qh, kh, vh = heads(q), heads(k), heads(v)

    # ---- Attention scores; 1/sqrt(dh) is pre-folded into the Q weights/bias ----
    scores = jnp.einsum('hqd,hkd->hqk', qh, kh,
                        preferred_element_type=jnp.float32)             # (H, S, S)

    # Additive key-padding mask built in-kernel from the per-batch length (SMEM scalar).
    length = lens_ref[b]
    col = jax.lax.broadcasted_iota(jnp.int32, (1, S), 1)                # (1, S)
    mask_add = jnp.where(col < length, 0.0, -1e9)                       # f32
    scores = scores + mask_add[None]                                    # (H, S, S)

    # Softmax in f32 — one reduce/exp pass for all heads; reciprocal on the EUP.
    scores = scores - jnp.max(scores, axis=-1, keepdims=True)
    p = jnp.exp(scores)
    p = p * pl.reciprocal(jnp.sum(p, axis=-1, keepdims=True), approx=True)

    ctx = jnp.einsum('hqk,hkd->hqd', p.astype(matmul_dtype), vh,
                     preferred_element_type=jnp.float32)                # (H, S, dh)

    # ---- Output projection: contract (head, dh) against wo reshaped to (H, dh, D).
    # Per-head accumulation (same total FLOPs as one (S,D)@(D,D)) — no back-transpose.
    attn = jnp.zeros((S, D), jnp.float32)
    for h in range(n_head):
        attn = attn + jnp.dot(ctx[h].astype(matmul_dtype), wo_ref[h],
                              preferred_element_type=jnp.float32)
    attn = attn + bo_ref[...]

    # dropout1 -> identity (eval); norm1(x + out) in f32
    h1 = _layer_norm(x + attn, g1_ref[...], be1_ref[...], eps)

    # ---- FeedForward: Linear -> ReLU -> (dropout) -> Linear ----
    ff = jnp.dot(h1.astype(matmul_dtype), w1_ref[...],
                 preferred_element_type=jnp.float32) + bf1_ref[...]
    ff = jnp.maximum(ff, 0.0)
    ff = jnp.dot(ff.astype(matmul_dtype), w2_ref[...],
                 preferred_element_type=jnp.float32) + bf2_ref[...]

    # dropout2 -> identity (eval); norm2(out + _x)
    out = _layer_norm(ff + h1, g2_ref[...], be2_ref[...], eps)
    out_ref[0] = out.astype(out_ref.dtype)


def encoder_layer(x, src_lengths, params, *, n_head, eps=1e-5,
                  matmul_dtype=jnp.bfloat16):
    """x: (B, S, D) float32;  src_lengths: (B,) int32 number of valid (unmasked) keys.

    A dense (B, S, S) padding mask `m` converts to lengths via m[:, 0, :].sum(-1).
    Use matmul_dtype=jnp.float32 for bit-closer parity with the PyTorch reference.
    """
    B, S, D = x.shape
    dh = D // n_head
    scale = 1.0 / (dh ** 0.5)

    # Fold the softmax scale into the Q projection (free, host-side constant fold),
    # fuse Q/K/V weights into one (D, 3D) matmul, and cast matmul weights to bf16
    # on the HBM side so the kernel never pays per-step cast / double-width DMA.
    wqkv = jnp.concatenate([params["wq"] * scale, params["wk"], params["wv"]],
                           axis=1).astype(matmul_dtype)                     # (D, 3D)
    bqkv = jnp.concatenate([params["bq"] * scale, params["bk"], params["bv"]],
                           axis=1)                                          # (1, 3D) f32
    wo_h = params["wo"].reshape(n_head, dh, D).astype(matmul_dtype)         # (H, dh, D)
    w1 = params["w1"].astype(matmul_dtype)
    w2 = params["w2"].astype(matmul_dtype)

    weights = [wqkv, bqkv, wo_h, params["bo"],
               params["g1"], params["be1"],
               w1, params["bf1"], w2, params["bf2"],
               params["g2"], params["be2"]]

    def resident(shape):
        nd = len(shape)
        return pl.BlockSpec(shape, lambda b, lens, _nd=nd: (0,) * _nd)

    kernel = functools.partial(encoder_layer_kernel, S, n_head, eps, matmul_dtype)

    out = pl.pallas_call(
        kernel,
        out_shape=jax.ShapeDtypeStruct((B, S, D), x.dtype),
        grid_spec=pltpu.PrefetchScalarGridSpec(
            num_scalar_prefetch=1,          # src_lengths -> SMEM
            grid=(B,),
            in_specs=[pl.BlockSpec((1, S, D), lambda b, lens: (b, 0, 0))]
                     + [resident(w.shape) for w in weights],
            out_specs=pl.BlockSpec((1, S, D), lambda b, lens: (b, 0, 0)),
        ),
        compiler_params=pltpu.CompilerParams(
            dimension_semantics=("parallel",),          # megacore sharding on v7x
            vmem_limit_bytes=64 * 1024 * 1024,
        ),
    )(src_lengths, x, *weights)
    return out


def init_params(key, dim_vector, dim_hidden):
    ks = jax.random.split(key, 12)
    s = 0.02
    D, H = dim_vector, dim_hidden
    return {
        # attention projections (stored as (in, out); equivalent to nn.Linear semantics)
        "wq": jax.random.normal(ks[0], (D, D), jnp.float32) * s,
        "bq": jax.random.normal(ks[1], (1, D), jnp.float32) * s,
        "wk": jax.random.normal(ks[2], (D, D), jnp.float32) * s,
        "bk": jax.random.normal(ks[3], (1, D), jnp.float32) * s,
        "wv": jax.random.normal(ks[4], (D, D), jnp.float32) * s,
        "bv": jax.random.normal(ks[5], (1, D), jnp.float32) * s,
        "wo": jax.random.normal(ks[6], (D, D), jnp.float32) * s,
        "bo": jax.random.normal(ks[7], (1, D), jnp.float32) * s,
        # LayerNorm1 (PyTorch default init: weight=1, bias=0)
        "g1": jnp.ones((1, D), jnp.float32),
        "be1": jnp.zeros((1, D), jnp.float32),
        # FeedForward
        "w1": jax.random.normal(ks[8], (D, H), jnp.float32) * s,
        "bf1": jax.random.normal(ks[9], (1, H), jnp.float32) * s,
        "w2": jax.random.normal(ks[10], (H, D), jnp.float32) * s,
        "bf2": jax.random.normal(ks[11], (1, D), jnp.float32) * s,
        # LayerNorm2
        "g2": jnp.ones((1, D), jnp.float32),
        "be2": jnp.zeros((1, D), jnp.float32),
    }


if __name__ == "__main__":
    # NOTE: toy shapes (D=32 < 128 lanes) give no perf signal — benchmark with
    # D / dim_hidden multiples of 128 (256 on v6e/v7x).
    B, S, D = 2, 8, 32
    n_head = 4
    dim_hidden = 64
    # dropout probability exists in the module but is identity in eval mode.

    key = jax.random.PRNGKey(0)
    k_x, k_p = jax.random.split(key)
    x = jax.random.normal(k_x, (B, S, D), jnp.float32)

    # padding-style src_mask: batch 0 attends to all 8 tokens, batch 1 to first 6.
    src_lengths = jnp.array([8, 6], dtype=jnp.int32)

    params = init_params(k_p, D, dim_hidden)

    out = encoder_layer(x, src_lengths, params, n_head=n_head)   # bf16 MXU, f32 accum
    out = jax.block_until_ready(out)
    assert out.shape == (B, S, D)
    print("KERNEL_OK")
</pallas_src>

<mosaic_0001>
module attributes {stable_mosaic.version = 11 : i64} {
  func.func @encoder_layer_kernel(%arg0: i32, %arg1: memref<2xi32, #tpu.memory_space<smem>>, %arg2: memref<1x8x32xf32, #tpu.memory_space<vmem>>, %arg3: memref<32x96xbf16, #tpu.memory_space<vmem>>, %arg4: memref<1x96xf32, #tpu.memory_space<vmem>>, %arg5: memref<4x8x32xbf16, #tpu.memory_space<vmem>>, %arg6: memref<1x32xf32, #tpu.memory_space<vmem>>, %arg7: memref<1x32xf32, #tpu.memory_space<vmem>>, %arg8: memref<1x32xf32, #tpu.memory_space<vmem>>, %arg9: memref<32x64xbf16, #tpu.memory_space<vmem>>, %arg10: memref<1x64xf32, #tpu.memory_space<vmem>>, %arg11: memref<64x32xbf16, #tpu.memory_space<vmem>>, %arg12: memref<1x32xf32, #tpu.memory_space<vmem>>, %arg13: memref<1x32xf32, #tpu.memory_space<vmem>>, %arg14: memref<1x32xf32, #tpu.memory_space<vmem>>, %arg15: memref<1x8x32xf32, #tpu.memory_space<vmem>>) attributes {dimension_semantics = [#tpu.dimension_semantics<parallel>], iteration_bounds = array<i64: 2>, scalar_prefetch = 1 : i64, scratch_operands = 0 : i64, tpu.core_type = #tpu.core_type<tc>, window_params = [{transform_indices = @transform_0, window_bounds = array<i64: 1, 8, 32>}, {pipeline_mode = #tpu.pipeline_mode<synchronous>, transform_indices = @transform_1, window_bounds = array<i64: 32, 96>}, {pipeline_mode = #tpu.pipeline_mode<synchronous>, transform_indices = @transform_2, window_bounds = array<i64: 1, 96>}, {pipeline_mode = #tpu.pipeline_mode<synchronous>, transform_indices = @transform_3, window_bounds = array<i64: 4, 8, 32>}, {pipeline_mode = #tpu.pipeline_mode<synchronous>, transform_indices = @transform_4, window_bounds = array<i64: 1, 32>}, {pipeline_mode = #tpu.pipeline_mode<synchronous>, transform_indices = @transform_5, window_bounds = array<i64: 1, 32>}, {pipeline_mode = #tpu.pipeline_mode<synchronous>, transform_indices = @transform_6, window_bounds = array<i64: 1, 32>}, {pipeline_mode = #tpu.pipeline_mode<synchronous>, transform_indices = @transform_7, window_bounds = array<i64: 32, 64>}, {pipeline_mode = #tpu.pipeline_mode<synchronous>, transform_indices = @transform_8, window_bounds = array<i64: 1, 64>}, {pipeline_mode = #tpu.pipeline_mode<synchronous>, transform_indices = @transform_9, window_bounds = array<i64: 64, 32>}, {pipeline_mode = #tpu.pipeline_mode<synchronous>, transform_indices = @transform_10, window_bounds = array<i64: 1, 32>}, {pipeline_mode = #tpu.pipeline_mode<synchronous>, transform_indices = @transform_11, window_bounds = array<i64: 1, 32>}, {pipeline_mode = #tpu.pipeline_mode<synchronous>, transform_indices = @transform_12, window_bounds = array<i64: 1, 32>}, {transform_indices = @transform_13, window_bounds = array<i64: 1, 8, 32>}]} {
    %c0 = arith.constant 0 : index
    %c0_0 = arith.constant 0 : index
    %c0_1 = arith.constant 0 : index
    %0 = vector.load %arg2[%c0, %c0_0, %c0_1] : memref<1x8x32xf32, #tpu.memory_space<vmem>>, vector<1x8x32xf32>
    %1 = vector.shape_cast %0 : vector<1x8x32xf32> to vector<8x32xf32>
    %2 = arith.truncf %1 : vector<8x32xf32> to vector<8x32xbf16>
    %c0_2 = arith.constant 0 : index
    %c0_3 = arith.constant 0 : index
    %3 = vector.load %arg3[%c0_2, %c0_3] : memref<32x96xbf16, #tpu.memory_space<vmem>>, vector<32x96xbf16>
    %cst = arith.constant dense<0.000000e+00> : vector<8x96xf32>
    %4 = tpu.matmul %2, %3, %cst {dimension_numbers = #tpu.dot_dimension_numbers<[1], [0], [0], [1], [0, 0, 1, 1], [], []>} : vector<8x32xbf16>, vector<32x96xbf16>, vector<8x96xf32> -> vector<8x96xf32>
    %c0_4 = arith.constant 0 : index
    %c0_5 = arith.constant 0 : index
    %5 = vector.load %arg4[%c0_4, %c0_5] : memref<1x96xf32, #tpu.memory_space<vmem>>, vector<1x96xf32>
    %6 = vector.broadcast %5 : vector<1x96xf32> to vector<8x96xf32>
    %7 = arith.addf %4, %6 : vector<8x96xf32>
    %8 = vector.extract_strided_slice %7 {offsets = [0, 0], sizes = [8, 32], strides = [1, 1]} : vector<8x96xf32> to vector<8x32xf32>
    %9 = vector.extract_strided_slice %7 {offsets = [0, 32], sizes = [8, 32], strides = [1, 1]} : vector<8x96xf32> to vector<8x32xf32>
    %10 = vector.extract_strided_slice %7 {offsets = [0, 64], sizes = [8, 32], strides = [1, 1]} : vector<8x96xf32> to vector<8x32xf32>
    %11 = vector.shape_cast %8 : vector<8x32xf32> to vector<8x4x8xf32>
    %12 = tpu.transpose %11, [1, 0, 2] : vector<8x4x8xf32> -> vector<4x8x8xf32>
    %13 = arith.truncf %12 : vector<4x8x8xf32> to vector<4x8x8xbf16>
    %14 = vector.shape_cast %9 : vector<8x32xf32> to vector<8x4x8xf32>
    %15 = tpu.transpose %14, [1, 0, 2] : vector<8x4x8xf32> -> vector<4x8x8xf32>
    %16 = arith.truncf %15 : vector<4x8x8xf32> to vector<4x8x8xbf16>
    %17 = vector.shape_cast %10 : vector<8x32xf32> to vector<8x4x8xf32>
    %18 = tpu.transpose %17, [1, 0, 2] : vector<8x4x8xf32> -> vector<4x8x8xf32>
    %19 = arith.truncf %18 : vector<4x8x8xf32> to vector<4x8x8xbf16>
    "tpu.trace_start"() <{level = 10 : i32, message = "hqd,hkd->hqk"}> : () -> ()
    %cst_6 = arith.constant dense<0.000000e+00> : vector<4x8x8xf32>
    %20 = tpu.matmul %13, %16, %cst_6 {dimension_numbers = #tpu.dot_dimension_numbers<[2], [2], [1], [1], [0, 0, 0, 1, 1, 1], [0], [0]>} : vector<4x8x8xbf16>, vector<4x8x8xbf16>, vector<4x8x8xf32> -> vector<4x8x8xf32>
    "tpu.trace_stop"() : () -> ()
    %21 = arith.index_cast %arg0 : i32 to index
    %22 = memref.load %arg1[%21] : memref<2xi32, #tpu.memory_space<smem>>
    %23 = tpu.iota {dimensions = array<i32: 1>} : vector<1x8xi32>
    %24 = vector.broadcast %22 : i32 to vector<1x8xi32>
    %25 = arith.cmpi slt, %23, %24 : vector<1x8xi32>
    %cst_7 = arith.constant 0.000000e+00 : f32
    %cst_8 = arith.constant -1.000000e+09 : f32
    %26 = vector.broadcast %cst_7 : f32 to vector<1x8xf32>
    %27 = vector.broadcast %cst_8 : f32 to vector<1x8xf32>
    %28 = arith.select %25, %26, %27 : vector<1x8xi1>, vector<1x8xf32>
    %29 = vector.shape_cast %28 : vector<1x8xf32> to vector<1x1x8xf32>
    %30 = vector.broadcast %29 : vector<1x1x8xf32> to vector<4x8x8xf32>
    %31 = arith.addf %20, %30 : vector<4x8x8xf32>
    %cst_9 = arith.constant dense<0xFF800000> : vector<4x8xf32>
    %32 = vector.multi_reduction <maximumf>, %31, %cst_9 [2] : vector<4x8x8xf32> to vector<4x8xf32>
    %33 = vector.shape_cast %32 : vector<4x8xf32> to vector<4x8x1xf32>
    %34 = vector.broadcast %33 : vector<4x8x1xf32> to vector<4x8x8xf32>
    %35 = arith.subf %31, %34 : vector<4x8x8xf32>
    %36 = math.exp %35 : vector<4x8x8xf32>
    %cst_10 = arith.constant dense<0.000000e+00> : vector<4x8xf32>
    %37 = vector.multi_reduction <add>, %36, %cst_10 [2] : vector<4x8x8xf32> to vector<4x8xf32>
    %38 = vector.shape_cast %37 : vector<4x8xf32> to vector<4x8x1xf32>
    %39 = tpu.reciprocal %38 {approx = true} : vector<4x8x1xf32> -> vector<4x8x1xf32>
    %40 = vector.broadcast %39 : vector<4x8x1xf32> to vector<4x8x8xf32>
    %41 = arith.mulf %36, %40 : vector<4x8x8xf32>
    %42 = arith.truncf %41 : vector<4x8x8xf32> to vector<4x8x8xbf16>
    "tpu.trace_start"() <{level = 10 : i32, message = "hqk,hkd->hqd"}> : () -> ()
    %cst_11 = arith.constant dense<0.000000e+00> : vector<4x8x8xf32>
    %43 = tpu.matmul %42, %19, %cst_11 {dimension_numbers = #tpu.dot_dimension_numbers<[2], [1], [1], [2], [0, 0, 0, 1, 1, 2], [0], [0]>} : vector<4x8x8xbf16>, vector<4x8x8xbf16>, vector<4x8x8xf32> -> vector<4x8x8xf32>
    %cst_12 = arith.constant 0.000000e+00 : f32
    "tpu.trace_stop"() : () -> ()
    %44 = vector.broadcast %cst_12 : f32 to vector<8x32xf32>
    %45 = vector.extract_strided_slice %43 {offsets = [0, 0, 0], sizes = [1, 8, 8], strides = [1, 1, 1]} : vector<4x8x8xf32> to vector<1x8x8xf32>
    %46 = vector.shape_cast %45 : vector<1x8x8xf32> to vector<8x8xf32>
    %47 = arith.truncf %46 : vector<8x8xf32> to vector<8x8xbf16>
    %c0_13 = arith.constant 0 : index
    %c0_14 = arith.constant 0 : index
    %c0_15 = arith.constant 0 : index
    %48 = vector.load %arg5[%c0_13, %c0_14, %c0_15] : memref<4x8x32xbf16, #tpu.memory_space<vmem>>, vector<1x8x32xbf16>
    %49 = vector.shape_cast %48 : vector<1x8x32xbf16> to vector<8x32xbf16>
    %cst_16 = arith.constant dense<0.000000e+00> : vector<8x32xf32>
    %50 = tpu.matmul %47, %49, %cst_16 {dimension_numbers = #tpu.dot_dimension_numbers<[1], [0], [0], [1], [0, 0, 1, 1], [], []>} : vector<8x8xbf16>, vector<8x32xbf16>, vector<8x32xf32> -> vector<8x32xf32>
    %51 = arith.addf %44, %50 : vector<8x32xf32>
    %52 = vector.extract_strided_slice %43 {offsets = [1, 0, 0], sizes = [1, 8, 8], strides = [1, 1, 1]} : vector<4x8x8xf32> to vector<1x8x8xf32>
    %53 = vector.shape_cast %52 : vector<1x8x8xf32> to vector<8x8xf32>
    %54 = arith.truncf %53 : vector<8x8xf32> to vector<8x8xbf16>
    %c1 = arith.constant 1 : index
    %c0_17 = arith.constant 0 : index
    %c0_18 = arith.constant 0 : index
    %55 = vector.load %arg5[%c1, %c0_17, %c0_18] : memref<4x8x32xbf16, #tpu.memory_space<vmem>>, vector<1x8x32xbf16>
    %56 = vector.shape_cast %55 : vector<1x8x32xbf16> to vector<8x32xbf16>
    %cst_19 = arith.constant dense<0.000000e+00> : vector<8x32xf32>
    %57 = tpu.matmul %54, %56, %cst_19 {dimension_numbers = #tpu.dot_dimension_numbers<[1], [0], [0], [1], [0, 0, 1, 1], [], []>} : vector<8x8xbf16>, vector<8x32xbf16>, vector<8x32xf32> -> vector<8x32xf32>
    %58 = arith.addf %51, %57 : vector<8x32xf32>
    %59 = vector.extract_strided_slice %43 {offsets = [2, 0, 0], sizes = [1, 8, 8], strides = [1, 1, 1]} : vector<4x8x8xf32> to vector<1x8x8xf32>
    %60 = vector.shape_cast %59 : vector<1x8x8xf32> to vector<8x8xf32>
    %61 = arith.truncf %60 : vector<8x8xf32> to vector<8x8xbf16>
    %c2 = arith.constant 2 : index
    %c0_20 = arith.constant 0 : index
    %c0_21 = arith.constant 0 : index
    %62 = vector.load %arg5[%c2, %c0_20, %c0_21] : memref<4x8x32xbf16, #tpu.memory_space<vmem>>, vector<1x8x32xbf16>
    %63 = vector.shape_cast %62 : vector<1x8x32xbf16> to vector<8x32xbf16>
    %cst_22 = arith.constant dense<0.000000e+00> : vector<8x32xf32>
    %64 = tpu.matmul %61, %63, %cst_22 {dimension_numbers = #tpu.dot_dimension_numbers<[1], [0], [0], [1], [0, 0, 1, 1], [], []>} : vector<8x8xbf16>, vector<8x32xbf16>, vector<8x32xf32> -> vector<8x32xf32>
    %65 = arith.addf %58, %64 : vector<8x32xf32>
    %66 = vector.extract_strided_slice %43 {offsets = [3, 0, 0], sizes = [1, 8, 8], strides = [1, 1, 1]} : vector<4x8x8xf32> to vector<1x8x8xf32>
    %67 = vector.shape_cast %66 : vector<1x8x8xf32> to vector<8x8xf32>
    %68 = arith.truncf %67 : vector<8x8xf32> to vector<8x8xbf16>
    %c3 = arith.constant 3 : index
    %c0_23 = arith.constant 0 : index
    %c0_24 = arith.constant 0 : index
    %69 = vector.load %arg5[%c3, %c0_23, %c0_24] : memref<4x8x32xbf16, #tpu.memory_space<vmem>>, vector<1x8x32xbf16>
    %70 = vector.shape_cast %69 : vector<1x8x32xbf16> to vector<8x32xbf16>
    %cst_25 = arith.constant dense<0.000000e+00> : vector<8x32xf32>
    %71 = tpu.matmul %68, %70, %cst_25 {dimension_numbers = #tpu.dot_dimension_numbers<[1], [0], [0], [1], [0, 0, 1, 1], [], []>} : vector<8x8xbf16>, vector<8x32xbf16>, vector<8x32xf32> -> vector<8x32xf32>
    %72 = arith.addf %65, %71 : vector<8x32xf32>
    %c0_26 = arith.constant 0 : index
    %c0_27 = arith.constant 0 : index
    %73 = vector.load %arg6[%c0_26, %c0_27] : memref<1x32xf32, #tpu.memory_space<vmem>>, vector<1x32xf32>
    %74 = vector.broadcast %73 : vector<1x32xf32> to vector<8x32xf32>
    %75 = arith.addf %72, %74 : vector<8x32xf32>
    %76 = arith.addf %1, %75 : vector<8x32xf32>
    %c0_28 = arith.constant 0 : index
    %c0_29 = arith.constant 0 : index
    %77 = vector.load %arg7[%c0_28, %c0_29] : memref<1x32xf32, #tpu.memory_space<vmem>>, vector<1x32xf32>
    %c0_30 = arith.constant 0 : index
    %c0_31 = arith.constant 0 : index
    %78 = vector.load %arg8[%c0_30, %c0_31] : memref<1x32xf32, #tpu.memory_space<vmem>>, vector<1x32xf32>
    %cst_32 = arith.constant dense<0.000000e+00> : vector<8xf32>
    %79 = vector.multi_reduction <add>, %76, %cst_32 [1] : vector<8x32xf32> to vector<8xf32>
    %80 = vector.shape_cast %79 : vector<8xf32> to vector<8x1xf32>
    %cst_33 = arith.constant 3.200000e+01 : f32
    %81 = vector.broadcast %cst_33 : f32 to vector<8x1xf32>
    %82 = arith.divf %80, %81 : vector<8x1xf32>
    %83 = vector.broadcast %82 : vector<8x1xf32> to vector<8x32xf32>
    %84 = arith.subf %76, %83 : vector<8x32xf32>
    %85 = arith.mulf %84, %84 : vector<8x32xf32>
    %cst_34 = arith.constant dense<0.000000e+00> : vector<8xf32>
    %86 = vector.multi_reduction <add>, %85, %cst_34 [1] : vector<8x32xf32> to vector<8xf32>
    %87 = vector.shape_cast %86 : vector<8xf32> to vector<8x1xf32>
    %cst_35 = arith.constant 3.200000e+01 : f32
    %88 = vector.broadcast %cst_35 : f32 to vector<8x1xf32>
    %89 = arith.divf %87, %88 : vector<8x1xf32>
    %90 = vector.broadcast %82 : vector<8x1xf32> to vector<8x32xf32>
    %91 = arith.subf %76, %90 : vector<8x32xf32>
    %cst_36 = arith.constant 9.99999974E-6 : f32
    %92 = vector.broadcast %cst_36 : f32 to vector<8x1xf32>
    %93 = arith.addf %89, %92 : vector<8x1xf32>
    %94 = math.rsqrt %93 : vector<8x1xf32>
    %95 = vector.broadcast %94 : vector<8x1xf32> to vector<8x32xf32>
    %96 = arith.mulf %91, %95 : vector<8x32xf32>
    %97 = vector.broadcast %77 : vector<1x32xf32> to vector<8x32xf32>
    %98 = arith.mulf %96, %97 : vector<8x32xf32>
    %99 = vector.broadcast %78 : vector<1x32xf32> to vector<8x32xf32>
    %100 = arith.addf %98, %99 : vector<8x32xf32>
    %101 = arith.truncf %100 : vector<8x32xf32> to vector<8x32xbf16>
    %c0_37 = arith.constant 0 : index
    %c0_38 = arith.constant 0 : index
    %102 = vector.load %arg9[%c0_37, %c0_38] : memref<32x64xbf16, #tpu.memory_space<vmem>>, vector<32x64xbf16>
    %cst_39 = arith.constant dense<0.000000e+00> : vector<8x64xf32>
    %103 = tpu.matmul %101, %102, %cst_39 {dimension_numbers = #tpu.dot_dimension_numbers<[1], [0], [0], [1], [0, 0, 1, 1], [], []>} : vector<8x32xbf16>, vector<32x64xbf16>, vector<8x64xf32> -> vector<8x64xf32>
    %c0_40 = arith.constant 0 : index
    %c0_41 = arith.constant 0 : index
    %104 = vector.load %arg10[%c0_40, %c0_41] : memref<1x64xf32, #tpu.memory_space<vmem>>, vector<1x64xf32>
    %105 = vector.broadcast %104 : vector<1x64xf32> to vector<8x64xf32>
    %106 = arith.addf %103, %105 : vector<8x64xf32>
    %cst_42 = arith.constant 0.000000e+00 : f32
    %107 = vector.broadcast %cst_42 : f32 to vector<8x64xf32>
    %108 = arith.maximumf %106, %107 : vector<8x64xf32>
    %109 = arith.truncf %108 : vector<8x64xf32> to vector<8x64xbf16>
    %c0_43 = arith.constant 0 : index
    %c0_44 = arith.constant 0 : index
    %110 = vector.load %arg11[%c0_43, %c0_44] : memref<64x32xbf16, #tpu.memory_space<vmem>>, vector<64x32xbf16>
    %cst_45 = arith.constant dense<0.000000e+00> : vector<8x32xf32>
    %111 = tpu.matmul %109, %110, %cst_45 {dimension_numbers = #tpu.dot_dimension_numbers<[1], [0], [0], [1], [0, 0, 1, 1], [], []>} : vector<8x64xbf16>, vector<64x32xbf16>, vector<8x32xf32> -> vector<8x32xf32>
    %c0_46 = arith.constant 0 : index
    %c0_47 = arith.constant 0 : index
    %112 = vector.load %arg12[%c0_46, %c0_47] : memref<1x32xf32, #tpu.memory_space<vmem>>, vector<1x32xf32>
    %113 = vector.broadcast %112 : vector<1x32xf32> to vector<8x32xf32>
    %114 = arith.addf %111, %113 : vector<8x32xf32>
    %115 = arith.addf %114, %100 : vector<8x32xf32>
    %c0_48 = arith.constant 0 : index
    %c0_49 = arith.constant 0 : index
    %116 = vector.load %arg13[%c0_48, %c0_49] : memref<1x32xf32, #tpu.memory_space<vmem>>, vector<1x32xf32>
    %c0_50 = arith.constant 0 : index
    %c0_51 = arith.constant 0 : index
    %117 = vector.load %arg14[%c0_50, %c0_51] : memref<1x32xf32, #tpu.memory_space<vmem>>, vector<1x32xf32>
    %cst_52 = arith.constant dense<0.000000e+00> : vector<8xf32>
    %118 = vector.multi_reduction <add>, %115, %cst_52 [1] : vector<8x32xf32> to vector<8xf32>
    %119 = vector.shape_cast %118 : vector<8xf32> to vector<8x1xf32>
    %cst_53 = arith.constant 3.200000e+01 : f32
    %120 = vector.broadcast %cst_53 : f32 to vector<8x1xf32>
    %121 = arith.divf %119, %120 : vector<8x1xf32>
    %122 = vector.broadcast %121 : vector<8x1xf32> to vector<8x32xf32>
    %123 = arith.subf %115, %122 : vector<8x32xf32>
    %124 = arith.mulf %123, %123 : vector<8x32xf32>
    %cst_54 = arith.constant dense<0.000000e+00> : vector<8xf32>
    %125 = vector.multi_reduction <add>, %124, %cst_54 [1] : vector<8x32xf32> to vector<8xf32>
    %126 = vector.shape_cast %125 : vector<8xf32> to vector<8x1xf32>
    %cst_55 = arith.constant 3.200000e+01 : f32
    %127 = vector.broadcast %cst_55 : f32 to vector<8x1xf32>
    %128 = arith.divf %126, %127 : vector<8x1xf32>
    %129 = vector.broadcast %121 : vector<8x1xf32> to vector<8x32xf32>
    %130 = arith.subf %115, %129 : vector<8x32xf32>
    %cst_56 = arith.constant 9.99999974E-6 : f32
    %131 = vector.broadcast %cst_56 : f32 to vector<8x1xf32>
    %132 = arith.addf %128, %131 : vector<8x1xf32>
    %133 = math.rsqrt %132 : vector<8x1xf32>
    %134 = vector.broadcast %133 : vector<8x1xf32> to vector<8x32xf32>
    %135 = arith.mulf %130, %134 : vector<8x32xf32>
    %136 = vector.broadcast %116 : vector<1x32xf32> to vector<8x32xf32>
    %137 = arith.mulf %135, %136 : vector<8x32xf32>
    %138 = vector.broadcast %117 : vector<1x32xf32> to vector<8x32xf32>
    %139 = arith.addf %137, %138 : vector<8x32xf32>
    %c0_57 = arith.constant 0 : index
    %c0_58 = arith.constant 0 : index
    %c0_59 = arith.constant 0 : index
    %140 = vector.load %arg15[%c0_57, %c0_58, %c0_59] : memref<1x8x32xf32, #tpu.memory_space<vmem>>, vector<1x8x32xf32>
    %141 = vector.shape_cast %140 : vector<1x8x32xf32> to vector<8x32xf32>
    %142 = vector.shape_cast %139 : vector<8x32xf32> to vector<1x8x32xf32>
    tpu.vector_store %arg15[%c0_57, %c0_58, %c0_59], %142 {strides = array<i32>} : memref<1x8x32xf32, #tpu.memory_space<vmem>>, vector<1x8x32xf32>,
    return
  }
  func.func @transform_0(%arg0: i32, %arg1: memref<2xi32, #tpu.memory_space<smem>>) -> (i32, i32, i32) {
    %c0_i32 = arith.constant 0 : i32
    %c0_i32_0 = arith.constant 0 : i32
    %c0_i32_1 = arith.constant 0 : i32
    return %arg0, %c0_i32, %c0_i32_0 : i32, i32, i32
  }
  func.func @transform_1(%arg0: i32, %arg1: memref<2xi32, #tpu.memory_space<smem>>) -> (i32, i32) {
    %c0_i32 = arith.constant 0 : i32
    %c0_i32_0 = arith.constant 0 : i32
    %c0_i32_1 = arith.constant 0 : i32
    return %c0_i32, %c0_i32_0 : i32, i32
  }
  func.func @transform_2(%arg0: i32, %arg1: memref<2xi32, #tpu.memory_space<smem>>) -> (i32, i32) {
    %c0_i32 = arith.constant 0 : i32
    %c0_i32_0 = arith.constant 0 : i32
    %c0_i32_1 = arith.constant 0 : i32
    return %c0_i32, %c0_i32_0 : i32, i32
  }
  func.func @transform_3(%arg0: i32, %arg1: memref<2xi32, #tpu.memory_space<smem>>) -> (i32, i32, i32) {
    %c0_i32 = arith.constant 0 : i32
    %c0_i32_0 = arith.constant 0 : i32
    %c0_i32_1 = arith.constant 0 : i32
    %c0_i32_2 = arith.constant 0 : i32
    return %c0_i32, %c0_i32_0, %c0_i32_1 : i32, i32, i32
  }
  func.func @transform_4(%arg0: i32, %arg1: memref<2xi32, #tpu.memory_space<smem>>) -> (i32, i32) {
    %c0_i32 = arith.constant 0 : i32
    %c0_i32_0 = arith.constant 0 : i32
    %c0_i32_1 = arith.constant 0 : i32
    return %c0_i32, %c0_i32_0 : i32, i32
  }
  func.func @transform_5(%arg0: i32, %arg1: memref<2xi32, #tpu.memory_space<smem>>) -> (i32, i32) {
    %c0_i32 = arith.constant 0 : i32
    %c0_i32_0 = arith.constant 0 : i32
    %c0_i32_1 = arith.constant 0 : i32
    return %c0_i32, %c0_i32_0 : i32, i32
  }
  func.func @transform_6(%arg0: i32, %arg1: memref<2xi32, #tpu.memory_space<smem>>) -> (i32, i32) {
    %c0_i32 = arith.constant 0 : i32
    %c0_i32_0 = arith.constant 0 : i32
    %c0_i32_1 = arith.constant 0 : i32
    return %c0_i32, %c0_i32_0 : i32, i32
  }
  func.func @transform_7(%arg0: i32, %arg1: memref<2xi32, #tpu.memory_space<smem>>) -> (i32, i32) {
    %c0_i32 = arith.constant 0 : i32
    %c0_i32_0 = arith.constant 0 : i32
    %c0_i32_1 = arith.constant 0 : i32
    return %c0_i32, %c0_i32_0 : i32, i32
  }
  func.func @transform_8(%arg0: i32, %arg1: memref<2xi32, #tpu.memory_space<smem>>) -> (i32, i32) {
    %c0_i32 = arith.constant 0 : i32
    %c0_i32_0 = arith.constant 0 : i32
    %c0_i32_1 = arith.constant 0 : i32
    return %c0_i32, %c0_i32_0 : i32, i32
  }
  func.func @transform_9(%arg0: i32, %arg1: memref<2xi32, #tpu.memory_space<smem>>) -> (i32, i32) {
    %c0_i32 = arith.constant 0 : i32
    %c0_i32_0 = arith.constant 0 : i32
    %c0_i32_1 = arith.constant 0 : i32
    return %c0_i32, %c0_i32_0 : i32, i32
  }
  func.func @transform_10(%arg0: i32, %arg1: memref<2xi32, #tpu.memory_space<smem>>) -> (i32, i32) {
    %c0_i32 = arith.constant 0 : i32
    %c0_i32_0 = arith.constant 0 : i32
    %c0_i32_1 = arith.constant 0 : i32
    return %c0_i32, %c0_i32_0 : i32, i32
  }
  func.func @transform_11(%arg0: i32, %arg1: memref<2xi32, #tpu.memory_space<smem>>) -> (i32, i32) {
    %c0_i32 = arith.constant 0 : i32
    %c0_i32_0 = arith.constant 0 : i32
    %c0_i32_1 = arith.constant 0 : i32
    return %c0_i32, %c0_i32_0 : i32, i32
  }
  func.func @transform_12(%arg0: i32, %arg1: memref<2xi32, #tpu.memory_space<smem>>) -> (i32, i32) {
    %c0_i32 = arith.constant 0 : i32
    %c0_i32_0 = arith.constant 0 : i32
    %c0_i32_1 = arith.constant 0 : i32
    return %c0_i32, %c0_i32_0 : i32, i32
  }
  func.func @transform_13(%arg0: i32, %arg1: memref<2xi32, #tpu.memory_space<smem>>) -> (i32, i32, i32) {
    %c0_i32 = arith.constant 0 : i32
    %c0_i32_0 = arith.constant 0 : i32
    %c0_i32_1 = arith.constant 0 : i32
    return %arg0, %c0_i32, %c0_i32_0 : i32, i32, i32
  }
}

</mosaic_0001>

<llo_original>
// kernel: tpu_custom_call.1
$region0: #{tpu_custom_call.1}
  #allocation0 [shape = 'u32[]', space=smem, size = 0x4, offset = 0x4, fixed_abs, tag = 'smem constant byte address 0x4 - core index']
  #allocation1 [shape = 'u32[144,128]{1,0:T(1,128)}', space=vmem, size = 0x12000, scoped, tag = 'internal scratch']
  #allocation2 [shape = 's32[1]{0}', space=sflag, size = 0x4, scoped, tag = 'scoped memory for tpu_custom_call.1']
  #allocation3 [shape = 'u8[512]{0}', space=smem, size = 0x200, scoped, tag = 'prefetched SMEM operand 0']
  %s0 = inlined_call_operand.hbm [shape: s32[2], index: 0, kind: input, shape index: {}]
  %s1 = inlined_call_operand.hbm [shape: f32[2,8,32], index: 1, kind: input, shape index: {}]
  %s2 = inlined_call_operand.hbm [shape: bf16[32,96], index: 2, kind: input, shape index: {}]
  %s3 = inlined_call_operand.hbm [shape: f32[1,96], index: 3, kind: input, shape index: {}]
  %s4 = inlined_call_operand.hbm [shape: bf16[4,8,32], index: 4, kind: input, shape index: {}]
  %s5 = inlined_call_operand.hbm [shape: f32[1,32], index: 5, kind: input, shape index: {}]
  %s6 = inlined_call_operand.hbm [shape: f32[1,32], index: 6, kind: input, shape index: {}]
  %s7 = inlined_call_operand.hbm [shape: f32[1,32], index: 7, kind: input, shape index: {}]
  %s8 = inlined_call_operand.hbm [shape: bf16[32,64], index: 8, kind: input, shape index: {}]
  %s9 = inlined_call_operand.hbm [shape: f32[1,64], index: 9, kind: input, shape index: {}]
  %s10 = inlined_call_operand.hbm [shape: bf16[64,32], index: 10, kind: input, shape index: {}]
  %s11 = inlined_call_operand.hbm [shape: f32[1,32], index: 11, kind: input, shape index: {}]
  %s12 = inlined_call_operand.hbm [shape: f32[1,32], index: 12, kind: input, shape index: {}]
  %s13 = inlined_call_operand.hbm [shape: f32[1,32], index: 13, kind: input, shape index: {}]
  %s14 = inlined_call_operand.hbm [shape: f32[2,8,32], index: 14, kind: output, shape index: {}]
  %s15 = sld [smem:[#allocation0]]
  $region137: #{tpu_custom_call.1} parent=0
    _
  %s17 = ssub.s32 1, %s15
  %s18 = scalar_select 0, %s17, %s15
  %20 = dma.hbm_to_smem %s0, 16, [#allocation3], [#allocation2]
  %21 = dma.done [#allocation2], 16
  %22 = sfence
  $region1: #{tpu_custom_call.1} parent=0
    #allocation4 [shape = 'u8[8192]{0}', space=vmem, size = 0x2000, scoped, tag = 'input window, operand 1']
    #allocation5 [shape = 's32[2]{0}', space=sflag, size = 0x8, scoped, tag = 'scoped memory for tpu_custom_call.1']
    #allocation6 [shape = 's32[2]{0}', space=sflag, size = 0x8, scoped, tag = 'scoped memory for tpu_custom_call.1']
    #allocation7 [shape = 'u8[8192]{0}', space=vmem, size = 0x2000, scoped, tag = 'input window, operand 2, single buffered']
    #allocation8 [shape = 's32[1]{0}', space=sflag, size = 0x4, scoped, tag = 'scoped memory for tpu_custom_call.1']
    #allocation9 [shape = 'u8[512]{0}', space=vmem, size = 0x400, scoped, tag = 'input window, operand 3, single buffered']
    #allocation10 [shape = 'u8[8192]{0}', space=vmem, size = 0x2000, scoped, tag = 'input window, operand 4, single buffered']
    #allocation11 [shape = 's32[1]{0}', space=sflag, size = 0x4, scoped, tag = 'scoped memory for tpu_custom_call.1']
    #allocation12 [shape = 'u8[512]{0}', space=vmem, size = 0x400, scoped, tag = 'input window, operand 5, single buffered']
    #allocation13 [shape = 'u8[512]{0}', space=vmem, size = 0x400, scoped, tag = 'input window, operand 6, single buffered']
    #allocation14 [shape = 's32[1]{0}', space=sflag, size = 0x4, scoped, tag = 'scoped memory for tpu_custom_call.1']
    #allocation15 [shape = 'u8[512]{0}', space=vmem, size = 0x400, scoped, tag = 'input window, operand 7, single buffered']
    #allocation16 [shape = 'u8[8192]{0}', space=vmem, size = 0x2000, scoped, tag = 'input window, operand 8, single buffered']
    #allocation17 [shape = 's32[1]{0}', space=sflag, size = 0x4, scoped, tag = 'scoped memory for tpu_custom_call.1']
    #allocation18 [shape = 'u8[512]{0}', space=vmem, size = 0x400, scoped, tag = 'input window, operand 9, single buffered']
    #allocation19 [shape = 'u8[16384]{0}', space=vmem, size = 0x4000, scoped, tag = 'input window, operand 10, single buffered']
    #allocation20 [shape = 's32[1]{0}', space=sflag, size = 0x4, scoped, tag = 'scoped memory for tpu_custom_call.1']
    #allocation21 [shape = 'u8[512]{0}', space=vmem, size = 0x400, scoped, tag = 'input window, operand 11, single buffered']
    #allocation22 [shape = 'u8[512]{0}', space=vmem, size = 0x400, scoped, tag = 'input window, operand 12, single buffered']
    #allocation23 [shape = 's32[1]{0}', space=sflag, size = 0x4, scoped, tag = 'scoped memory for tpu_custom_call.1']
    #allocation24 [shape = 'u8[512]{0}', space=vmem, size = 0x400, scoped, tag = 'input window, operand 13, single buffered']
    #allocation25 [shape = 'u8[8192]{0}', space=vmem, size = 0x2000, scoped, tag = 'output window, operand 0']
    %23 = vsyncpa [#allocation5], 0
    %s24 = scalar_lea.sflag [#allocation5], 1
    %25 = vsyncpa %s24, 0
    %26 = vsyncpa [#allocation8], 0
    %27 = vsyncpa [#allocation11], 0
    %28 = vsyncpa [#allocation14], 0
    %29 = vsyncpa [#allocation17], 0
    %30 = vsyncpa [#allocation20], 0
    %31 = vsyncpa [#allocation23], 0
    %32 = vsyncpa [#allocation6], 0
    %s33 = scalar_lea.sflag [#allocation6], 1
    %34 = vsyncpa %s33, 0
    loop: start=0, step=1, limit=4
    $region2: #{tpu_custom_call.1} parent=1 // loop_pre_header
      _
    $region3: #{tpu_custom_call.1} parent=1 // loop_header
      %s36 = sphi 0, %s40
      %p37 = scmp.ge.s32.totalorder %s36, 4
      %s46 = sphi 0, %s48
      %s49 = sphi 0, %s46
      %s50 = sphi 0, %s49
      %s66 = sphi 0, %s50
      %s70 = sphi 0, %s70
      %s72 = sphi 0, %s70
      %s73 = sphi 0, %s72
      %s87 = sphi 0, %s73
      %s91 = sphi 0, %s91
      %s93 = sphi 0, %s91
      %s94 = sphi 0, %s93
      %s108 = sphi 0, %s94
      %s112 = sphi 0, %s112
      %s114 = sphi 0, %s112
      %s115 = sphi 0, %s114
      %s129 = sphi 0, %s115
      %s133 = sphi 0, %s133
      %s135 = sphi 0, %s133
      %s136 = sphi 0, %s135
      %s150 = sphi 0, %s136
      %s154 = sphi 0, %s154
      %s156 = sphi 0, %s154
      %s157 = sphi 0, %s156
      %s171 = sphi 0, %s157
      %s175 = sphi 0, %s175
      %s177 = sphi 0, %s175
      %s178 = sphi 0, %s177
      %s192 = sphi 0, %s178
      %s196 = sphi 0, %s196
      %s198 = sphi 0, %s196
      %s199 = sphi 0, %s198
      %s213 = sphi 0, %s199
      %s217 = sphi 0, %s217
      %s219 = sphi 0, %s217
      %s220 = sphi 0, %s219
      %s234 = sphi 0, %s220
      %s238 = sphi 0, %s238
      %s240 = sphi 0, %s238
      %s241 = sphi 0, %s240
      %s255 = sphi 0, %s241
      %s259 = sphi 0, %s259
      %s261 = sphi 0, %s259
      %s262 = sphi 0, %s261
      %s276 = sphi 0, %s262
      %s280 = sphi 0, %s280
      %s282 = sphi 0, %s280
      %s283 = sphi 0, %s282
      %s297 = sphi 0, %s283
      %s301 = sphi 0, %s301
      %s303 = sphi 0, %s301
      %s304 = sphi 0, %s303
      %s318 = sphi 0, %s304
      %s324 = sphi 0, %s326
      %s327 = sphi 0, %s324
      %s328 = sphi 0, %s327
      %s344 = sphi 0, %s328
    $region4: #{tpu_custom_call.1} parent=1 // loop_header_branch
      %39 = sbr.rel (%p37) target = $region8
    $region5: #{tpu_custom_call.1} parent=1 // loop_body
      %s41 = ssub.s32 %s36, 1
      %s42 = ssub.s32 %s36, 2
      %s43 = sadd.s32 %s36, 1
      %s44 = ssub.s32 %s36, %s43
      %p45 = scmp.eq.s32.totalorder %s44, 0
      %s47 = sadd.s32 %s46, 1
      %s48 = scalar_select %p45, %s46, %s47
      %p51 = pneg %p45
      %p52 = scmp.eq.s32.totalorder %s36, 1
      %p53 = por %p51, %p52
      %p54 = scmp.ne.s32.totalorder %s46, %s49
      %p55 = scmp.eq.s32.totalorder %s36, 0
      %p56 = por %p54, %p55
      %p57 = scmp.ne.s32.totalorder %s46, %s49
      %p58 = scmp.eq.s32.totalorder %s41, 1
      %p59 = por %p57, %p58
      %p60 = scmp.ne.s32.totalorder %s49, %s50
      %p61 = scmp.eq.s32.totalorder %s41, 0
      %p62 = por %p60, %p61
      %p63 = scmp.ne.s32.totalorder %s49, %s50
      %p64 = scmp.eq.s32.totalorder %s42, 1
      %p65 = por %p63, %p64
      %p67 = scmp.ne.s32.totalorder %s50, %s66
      %p68 = scmp.eq.s32.totalorder %s42, 0
      %p69 = por %p67, %p68
      %s71 = sadd.s32 %s70, 1
      %p74 = scmp.eq.s32.totalorder %s36, 1
      %p75 = scmp.ne.s32.totalorder %s70, %s72
      %p76 = scmp.eq.s32.totalorder %s36, 0
      %p77 = por %p75, %p76
      %p78 = scmp.ne.s32.totalorder %s70, %s72
      %p79 = scmp.eq.s32.totalorder %s41, 1
      %p80 = por %p78, %p79
      %p81 = scmp.ne.s32.totalorder %s72, %s73
      %p82 = scmp.eq.s32.totalorder %s41, 0
      %p83 = por %p81, %p82
      %p84 = scmp.ne.s32.totalorder %s72, %s73
      %p85 = scmp.eq.s32.totalorder %s42, 1
      %p86 = por %p84, %p85
      %p88 = scmp.ne.s32.totalorder %s73, %s87
      %p89 = scmp.eq.s32.totalorder %s42, 0
      %p90 = por %p88, %p89
      %s92 = sadd.s32 %s91, 1
      %p95 = scmp.eq.s32.totalorder %s36, 1
      %p96 = scmp.ne.s32.totalorder %s91, %s93
      %p97 = scmp.eq.s32.totalorder %s36, 0
      %p98 = por %p96, %p97
      %p99 = scmp.ne.s32.totalorder %s91, %s93
      %p100 = scmp.eq.s32.totalorder %s41, 1
      %p101 = por %p99, %p100
      %p102 = scmp.ne.s32.totalorder %s93, %s94
      %p103 = scmp.eq.s32.totalorder %s41, 0
      %p104 = por %p102, %p103
      %p105 = scmp.ne.s32.totalorder %s93, %s94
      %p106 = scmp.eq.s32.totalorder %s42, 1
      %p107 = por %p105, %p106
      %p109 = scmp.ne.s32.totalorder %s94, %s108
      %p110 = scmp.eq.s32.totalorder %s42, 0
      %p111 = por %p109, %p110
      %s113 = sadd.s32 %s112, 1
      %p116 = scmp.eq.s32.totalorder %s36, 1
      %p117 = scmp.ne.s32.totalorder %s112, %s114
      %p118 = scmp.eq.s32.totalorder %s36, 0
      %p119 = por %p117, %p118
      %p120 = scmp.ne.s32.totalorder %s112, %s114
      %p121 = scmp.eq.s32.totalorder %s41, 1
      %p122 = por %p120, %p121
      %p123 = scmp.ne.s32.totalorder %s114, %s115
      %p124 = scmp.eq.s32.totalorder %s41, 0
      %p125 = por %p123, %p124
      %p126 = scmp.ne.s32.totalorder %s114, %s115
      %p127 = scmp.eq.s32.totalorder %s42, 1
      %p128 = por %p126, %p127
      %p130 = scmp.ne.s32.totalorder %s115, %s129
      %p131 = scmp.eq.s32.totalorder %s42, 0
      %p132 = por %p130, %p131
      %s134 = sadd.s32 %s133, 1
      %p137 = scmp.eq.s32.totalorder %s36, 1
      %p138 = scmp.ne.s32.totalorder %s133, %s135
      %p139 = scmp.eq.s32.totalorder %s36, 0
      %p140 = por %p138, %p139
      %p141 = scmp.ne.s32.totalorder %s133, %s135
      %p142 = scmp.eq.s32.totalorder %s41, 1
      %p143 = por %p141, %p142
      %p144 = scmp.ne.s32.totalorder %s135, %s136
      %p145 = scmp.eq.s32.totalorder %s41, 0
      %p146 = por %p144, %p145
      %p147 = scmp.ne.s32.totalorder %s135, %s136
      %p148 = scmp.eq.s32.totalorder %s42, 1
      %p149 = por %p147, %p148
      %p151 = scmp.ne.s32.totalorder %s136, %s150
      %p152 = scmp.eq.s32.totalorder %s42, 0
      %p153 = por %p151, %p152
      %s155 = sadd.s32 %s154, 1
      %p158 = scmp.eq.s32.totalorder %s36, 1
      %p159 = scmp.ne.s32.totalorder %s154, %s156
      %p160 = scmp.eq.s32.totalorder %s36, 0
      %p161 = por %p159, %p160
      %p162 = scmp.ne.s32.totalorder %s154, %s156
      %p163 = scmp.eq.s32.totalorder %s41, 1
      %p164 = por %p162, %p163
      %p165 = scmp.ne.s32.totalorder %s156, %s157
      %p166 = scmp.eq.s32.totalorder %s41, 0
      %p167 = por %p165, %p166
      %p168 = scmp.ne.s32.totalorder %s156, %s157
      %p169 = scmp.eq.s32.totalorder %s42, 1
      %p170 = por %p168, %p169
      %p172 = scmp.ne.s32.totalorder %s157, %s171
      %p173 = scmp.eq.s32.totalorder %s42, 0
      %p174 = por %p172, %p173
      %s176 = sadd.s32 %s175, 1
      %p179 = scmp.eq.s32.totalorder %s36, 1
      %p180 = scmp.ne.s32.totalorder %s175, %s177
      %p181 = scmp.eq.s32.totalorder %s36, 0
      %p182 = por %p180, %p181
      %p183 = scmp.ne.s32.totalorder %s175, %s177
      %p184 = scmp.eq.s32.totalorder %s41, 1
      %p185 = por %p183, %p184
      %p186 = scmp.ne.s32.totalorder %s177, %s178
      %p187 = scmp.eq.s32.totalorder %s41, 0
      %p188 = por %p186, %p187
      %p189 = scmp.ne.s32.totalorder %s177, %s178
      %p190 = scmp.eq.s32.totalorder %s42, 1
      %p191 = por %p189, %p190
      %p193 = scmp.ne.s32.totalorder %s178, %s192
      %p194 = scmp.eq.s32.totalorder %s42, 0
      %p195 = por %p193, %p194
      %s197 = sadd.s32 %s196, 1
      %p200 = scmp.eq.s32.totalorder %s36, 1
      %p201 = scmp.ne.s32.totalorder %s196, %s198
      %p202 = scmp.eq.s32.totalorder %s36, 0
      %p203 = por %p201, %p202
      %p204 = scmp.ne.s32.totalorder %s196, %s198
      %p205 = scmp.eq.s32.totalorder %s41, 1
      %p206 = por %p204, %p205
      %p207 = scmp.ne.s32.totalorder %s198, %s199
      %p208 = scmp.eq.s32.totalorder %s41, 0
      %p209 = por %p207, %p208
      %p210 = scmp.ne.s32.totalorder %s198, %s199
      %p211 = scmp.eq.s32.totalorder %s42, 1
      %p212 = por %p210, %p211
      %p214 = scmp.ne.s32.totalorder %s199, %s213
      %p215 = scmp.eq.s32.totalorder %s42, 0
      %p216 = por %p214, %p215
      %s218 = sadd.s32 %s217, 1
      %p221 = scmp.eq.s32.totalorder %s36, 1
      %p222 = scmp.ne.s32.totalorder %s217, %s219
      %p223 = scmp.eq.s32.totalorder %s36, 0
      %p224 = por %p222, %p223
      %p225 = scmp.ne.s32.totalorder %s217, %s219
      %p226 = scmp.eq.s32.totalorder %s41, 1
      %p227 = por %p225, %p226
      %p228 = scmp.ne.s32.totalorder %s219, %s220
      %p229 = scmp.eq.s32.totalorder %s41, 0
      %p230 = por %p228, %p229
      %p231 = scmp.ne.s32.totalorder %s219, %s220
      %p232 = scmp.eq.s32.totalorder %s42, 1
      %p233 = por %p231, %p232
      %p235 = scmp.ne.s32.totalorder %s220, %s234
      %p236 = scmp.eq.s32.totalorder %s42, 0
      %p237 = por %p235, %p236
      %s239 = sadd.s32 %s238, 1
      %p242 = scmp.eq.s32.totalorder %s36, 1
      %p243 = scmp.ne.s32.totalorder %s238, %s240
      %p244 = scmp.eq.s32.totalorder %s36, 0
      %p245 = por %p243, %p244
      %p246 = scmp.ne.s32.totalorder %s238, %s240
      %p247 = scmp.eq.s32.totalorder %s41, 1
      %p248 = por %p246, %p247
      %p249 = scmp.ne.s32.totalorder %s240, %s241
      %p250 = scmp.eq.s32.totalorder %s41, 0
      %p251 = por %p249, %p250
      %p252 = scmp.ne.s32.totalorder %s240, %s241
      %p253 = scmp.eq.s32.totalorder %s42, 1
      %p254 = por %p252, %p253
      %p256 = scmp.ne.s32.totalorder %s241, %s255
      %p257 = scmp.eq.s32.totalorder %s42, 0
      %p258 = por %p256, %p257
      %s260 = sadd.s32 %s259, 1
      %p263 = scmp.eq.s32.totalorder %s36, 1
      %p264 = scmp.ne.s32.totalorder %s259, %s261
      %p265 = scmp.eq.s32.totalorder %s36, 0
      %p266 = por %p264, %p265
      %p267 = scmp.ne.s32.totalorder %s259, %s261
      %p268 = scmp.eq.s32.totalorder %s41, 1
      %p269 = por %p267, %p268
      %p270 = scmp.ne.s32.totalorder %s261, %s262
      %p271 = scmp.eq.s32.totalorder %s41, 0
      %p272 = por %p270, %p271
      %p273 = scmp.ne.s32.totalorder %s261, %s262
      %p274 = scmp.eq.s32.totalorder %s42, 1
      %p275 = por %p273, %p274
      %p277 = scmp.ne.s32.totalorder %s262, %s276
      %p278 = scmp.eq.s32.totalorder %s42, 0
      %p279 = por %p277, %p278
      %s281 = sadd.s32 %s280, 1
      %p284 = scmp.eq.s32.totalorder %s36, 1
      %p285 = scmp.ne.s32.totalorder %s280, %s282
      %p286 = scmp.eq.s32.totalorder %s36, 0
      %p287 = por %p285, %p286
      %p288 = scmp.ne.s32.totalorder %s280, %s282
      %p289 = scmp.eq.s32.totalorder %s41, 1
      %p290 = por %p288, %p289
      %p291 = scmp.ne.s32.totalorder %s282, %s283
      %p292 = scmp.eq.s32.totalorder %s41, 0
      %p293 = por %p291, %p292
      %p294 = scmp.ne.s32.totalorder %s282, %s283
      %p295 = scmp.eq.s32.totalorder %s42, 1
      %p296 = por %p294, %p295
      %p298 = scmp.ne.s32.totalorder %s283, %s297
      %p299 = scmp.eq.s32.totalorder %s42, 0
      %p300 = por %p298, %p299
      %s302 = sadd.s32 %s301, 1
      %p305 = scmp.eq.s32.totalorder %s36, 1
      %p306 = scmp.ne.s32.totalorder %s301, %s303
      %p307 = scmp.eq.s32.totalorder %s36, 0
      %p308 = por %p306, %p307
      %p309 = scmp.ne.s32.totalorder %s301, %s303
      %p310 = scmp.eq.s32.totalorder %s41, 1
      %p311 = por %p309, %p310
      %p312 = scmp.ne.s32.totalorder %s303, %s304
      %p313 = scmp.eq.s32.totalorder %s41, 0
      %p314 = por %p312, %p313
      %p315 = scmp.ne.s32.totalorder %s303, %s304
      %p316 = scmp.eq.s32.totalorder %s42, 1
      %p317 = por %p315, %p316
      %p319 = scmp.ne.s32.totalorder %s304, %s318
      %p320 = scmp.eq.s32.totalorder %s42, 0
      %p321 = por %p319, %p320
      %s322 = ssub.s32 %s36, %s43
      %p323 = scmp.eq.s32.totalorder %s322, 0
      %s325 = sadd.s32 %s324, 1
      %s326 = scalar_select %p323, %s324, %s325
      %p329 = pneg %p323
      %p330 = scmp.eq.s32.totalorder %s36, 1
      %p331 = por %p329, %p330
      %p332 = scmp.ne.s32.totalorder %s324, %s327
      %p333 = scmp.eq.s32.totalorder %s36, 0
      %p334 = por %p332, %p333
      %p335 = scmp.ne.s32.totalorder %s324, %s327
      %p336 = scmp.eq.s32.totalorder %s41, 1
      %p337 = por %p335, %p336
      %p338 = scmp.ne.s32.totalorder %s327, %s328
      %p339 = scmp.eq.s32.totalorder %s41, 0
      %p340 = por %p338, %p339
      %p341 = scmp.ne.s32.totalorder %s327, %s328
      %p342 = scmp.eq.s32.totalorder %s42, 1
      %p343 = por %p341, %p342
      %p345 = scmp.ne.s32.totalorder %s328, %s344
      %p346 = scmp.eq.s32.totalorder %s42, 0
      %p347 = por %p345, %p346
      %p348 = scmp.le.s32.totalorder 1, %s36
      %p349 = scmp.lt.s32.totalorder %s36, 3
      %p350 = pnand %p348, %p349
      %p351 = pneg %p350
      // Predicated region
      $region9: #{tpu_custom_call.1} parent=5 // pred_check
        _
      $region10: #{tpu_custom_call.1} parent=5 // pred_check_branch
        %353 = sbr.rel (%p350) target = $region12
      $region11: #{tpu_custom_call.1} parent=5 // pred_region
        %s354 = ssub.s32 %s36, 1
        // Predicated region
        $region13: #{tpu_custom_call.1} parent=11 // pred_check
          %p355 = pneg %p83
        $region14: #{tpu_custom_call.1} parent=11 // pred_check_branch
          %357 = sbr.rel (%p355) target = $region16
        $region15: #{tpu_custom_call.1} parent=11 // pred_region
          %s359 = ssub.s32 256, 256
          %360 = vsyncadd [#allocation8], %s359
          %s361 = sshll.u32 [#allocation7], 4
          %s362 = int_to_ptr.vmem [resolvable:$true] %s361
          %367 = dma.hbm_to_vmem [thread:$0]  %s2, 256, %s362, [#allocation8], 64, 64, 4
        $region16: #{tpu_custom_call.1} parent=11 // pred_fallthru
          _
        // Predicated region
        $region17: #{tpu_custom_call.1} parent=11 // pred_check
          %p368 = pneg %p104
        $region18: #{tpu_custom_call.1} parent=11 // pred_check_branch
          %370 = sbr.rel (%p368) target = $region20
        $region19: #{tpu_custom_call.1} parent=11 // pred_region
          %s372 = ssub.s32 16, 16
          %373 = vsyncadd [#allocation8], %s372
          %s375 = sshll.u32 [#allocation9], 4
          %s376 = int_to_ptr.vmem [resolvable:$true] %s375
          %378 = dma.hbm_to_vmem [thread:$0]  %s3, 16, %s376, [#allocation8]
        $region20: #{tpu_custom_call.1} parent=11 // pred_fallthru
          _
        // Predicated region
        $region21: #{tpu_custom_call.1} parent=11 // pred_check
          %p379 = pneg %p125
        $region22: #{tpu_custom_call.1} parent=11 // pred_check_branch
          %381 = sbr.rel (%p379) target = $region24
        $region23: #{tpu_custom_call.1} parent=11 // pred_region
          %s383 = ssub.s32 256, 256
          %384 = vsyncadd [#allocation11], %s383
          %s385 = sshll.u32 [#allocation10], 4
          %s386 = int_to_ptr.vmem [resolvable:$true] %s385
          %391 = dma.hbm_to_vmem [thread:$0]  %s4, 256, %s386, [#allocation11], 64, 64, 4
        $region24: #{tpu_custom_call.1} parent=11 // pred_fallthru
          _
        // Predicated region
        $region25: #{tpu_custom_call.1} parent=11 // pred_check
          %p392 = pneg %p146
        $region26: #{tpu_custom_call.1} parent=11 // pred_check_branch
          %394 = sbr.rel (%p392) target = $region28
        $region27: #{tpu_custom_call.1} parent=11 // pred_region
          %s396 = ssub.s32 16, 16
          %397 = vsyncadd [#allocation11], %s396
          %s399 = sshll.u32 [#allocation12], 4
          %s400 = int_to_ptr.vmem [resolvable:$true] %s399
          %402 = dma.hbm_to_vmem [thread:$0]  %s5, 16, %s400, [#allocation11]
        $region28: #{tpu_custom_call.1} parent=11 // pred_fallthru
          _
        // Predicated region
        $region29: #{tpu_custom_call.1} parent=11 // pred_check
          %p403 = pneg %p167
        $region30: #{tpu_custom_call.1} parent=11 // pred_check_branch
          %405 = sbr.rel (%p403) target = $region32
        $region31: #{tpu_custom_call.1} parent=11 // pred_region
          %s407 = ssub.s32 16, 16
          %408 = vsyncadd [#allocation14], %s407
          %s410 = sshll.u32 [#allocation13], 4
          %s411 = int_to_ptr.vmem [resolvable:$true] %s410
          %413 = dma.hbm_to_vmem [thread:$0]  %s6, 16, %s411, [#allocation14]
        $region32: #{tpu_custom_call.1} parent=11 // pred_fallthru
          _
        // Predicated region
        $region33: #{tpu_custom_call.1} parent=11 // pred_check
          %p414 = pneg %p188
        $region34: #{tpu_custom_call.1} parent=11 // pred_check_branch
          %416 = sbr.rel (%p414) target = $region36
        $region35: #{tpu_custom_call.1} parent=11 // pred_region
          %s418 = ssub.s32 16, 16
          %419 = vsyncadd [#allocation14], %s418
          %s421 = sshll.u32 [#allocation15], 4
          %s422 = int_to_ptr.vmem [resolvable:$true] %s421
          %424 = dma.hbm_to_vmem [thread:$0]  %s7, 16, %s422, [#allocation14]
        $region36: #{tpu_custom_call.1} parent=11 // pred_fallthru
          _
        // Predicated region
        $region37: #{tpu_custom_call.1} parent=11 // pred_check
          %p425 = pneg %p209
        $region38: #{tpu_custom_call.1} parent=11 // pred_check_branch
          %427 = sbr.rel (%p425) target = $region40
        $region39: #{tpu_custom_call.1} parent=11 // pred_region
          %s429 = ssub.s32 256, 256
          %430 = vsyncadd [#allocation17], %s429
          %s431 = sshll.u32 [#allocation16], 4
          %s432 = int_to_ptr.vmem [resolvable:$true] %s431
          %437 = dma.hbm_to_vmem [thread:$0]  %s8, 256, %s432, [#allocation17], 64, 64, 4
        $region40: #{tpu_custom_call.1} parent=11 // pred_fallthru
          _
        // Predicated region
        $region41: #{tpu_custom_call.1} parent=11 // pred_check
          %p438 = pneg %p230
        $region42: #{tpu_custom_call.1} parent=11 // pred_check_branch
          %440 = sbr.rel (%p438) target = $region44
        $region43: #{tpu_custom_call.1} parent=11 // pred_region
          %s442 = ssub.s32 16, 16
          %443 = vsyncadd [#allocation17], %s442
          %s445 = sshll.u32 [#allocation18], 4
          %s446 = int_to_ptr.vmem [resolvable:$true] %s445
          %448 = dma.hbm_to_vmem [thread:$0]  %s9, 16, %s446, [#allocation17]
        $region44: #{tpu_custom_call.1} parent=11 // pred_fallthru
          _
        // Predicated region
        $region45: #{tpu_custom_call.1} parent=11 // pred_check
          %p449 = pneg %p251
        $region46: #{tpu_custom_call.1} parent=11 // pred_check_branch
          %451 = sbr.rel (%p449) target = $region48
        $region47: #{tpu_custom_call.1} parent=11 // pred_region
          %s453 = ssub.s32 512, 512
          %454 = vsyncadd [#allocation20], %s453
          %s455 = sshll.u32 [#allocation19], 4
          %s456 = int_to_ptr.vmem [resolvable:$true] %s455
          %461 = dma.hbm_to_vmem [thread:$0]  %s10, 512, %s456, [#allocation20], 64, 64, 4
        $region48: #{tpu_custom_call.1} parent=11 // pred_fallthru
          _
        // Predicated region
        $region49: #{tpu_custom_call.1} parent=11 // pred_check
          %p462 = pneg %p272
        $region50: #{tpu_custom_call.1} parent=11 // pred_check_branch
          %464 = sbr.rel (%p462) target = $region52
        $region51: #{tpu_custom_call.1} parent=11 // pred_region
          %s466 = ssub.s32 16, 16
          %467 = vsyncadd [#allocation20], %s466
          %s469 = sshll.u32 [#allocation21], 4
          %s470 = int_to_ptr.vmem [resolvable:$true] %s469
          %472 = dma.hbm_to_vmem [thread:$0]  %s11, 16, %s470, [#allocation20]
        $region52: #{tpu_custom_call.1} parent=11 // pred_fallthru
          _
        // Predicated region
        $region53: #{tpu_custom_call.1} parent=11 // pred_check
          %p473 = pneg %p293
        $region54: #{tpu_custom_call.1} parent=11 // pred_check_branch
          %475 = sbr.rel (%p473) target = $region56
        $region55: #{tpu_custom_call.1} parent=11 // pred_region
          %s477 = ssub.s32 16, 16
          %478 = vsyncadd [#allocation23], %s477
          %s480 = sshll.u32 [#allocation22], 4
          %s481 = int_to_ptr.vmem [resolvable:$true] %s480
          %483 = dma.hbm_to_vmem [thread:$0]  %s12, 16, %s481, [#allocation23]
        $region56: #{tpu_custom_call.1} parent=11 // pred_fallthru
          _
        // Predicated region
        $region57: #{tpu_custom_call.1} parent=11 // pred_check
          %p484 = pneg %p314
        $region58: #{tpu_custom_call.1} parent=11 // pred_check_branch
          %486 = sbr.rel (%p484) target = $region60
        $region59: #{tpu_custom_call.1} parent=11 // pred_region
          %s488 = ssub.s32 16, 16
          %489 = vsyncadd [#allocation23], %s488
          %s491 = sshll.u32 [#allocation24], 4
          %s492 = int_to_ptr.vmem [resolvable:$true] %s491
          %494 = dma.hbm_to_vmem [thread:$0]  %s13, 16, %s492, [#allocation23]
        $region60: #{tpu_custom_call.1} parent=11 // pred_fallthru
          _
      $region12: #{tpu_custom_call.1} parent=5 // pred_fallthru
        _
      %p495 = scmp.lt.s32.totalorder %s36, 2
      // Predicated region
      $region61: #{tpu_custom_call.1} parent=5 // pred_check
        %p496 = pneg %p495
      $region62: #{tpu_custom_call.1} parent=5 // pred_check_branch
        %498 = sbr.rel (%p496) target = $region64
      $region63: #{tpu_custom_call.1} parent=5 // pred_region
        // Predicated region
        $region65: #{tpu_custom_call.1} parent=63 // pred_check
          %p499 = pneg %p56
        $region66: #{tpu_custom_call.1} parent=63 // pred_check_branch
          %501 = sbr.rel (%p499) target = $region68
        $region67: #{tpu_custom_call.1} parent=63 // pred_region
          %s502 = sand.u32 %s46, 1
          %s503 = scalar_lea.sflag [#allocation5], %s502
          %s504 = sand.u32 %s46, 1
          %s505 = smul.addr %s504, 8
          %s506 = scalar_lea.vmem [#allocation4], %s505
          %s508 = ssub.s32 128, 128
          %509 = vsyncadd %s503, %s508
          %s510 = smul.addr %s36, 128
          %s511 = scalar_lea.hbm %s1, %s510
          %s513 = sshll.u32 %s506, 4
          %s514 = int_to_ptr.vmem [resolvable:$true] %s513
          %516 = dma.hbm_to_vmem [thread:$0]  %s511, 128, %s514, %s503
        $region68: #{tpu_custom_call.1} parent=63 // pred_fallthru
          _
      $region64: #{tpu_custom_call.1} parent=5 // pred_fallthru
        _
      %p517 = scmp.le.s32.totalorder 1, %s36
      %p518 = scmp.lt.s32.totalorder %s36, 3
      %p519 = pnand %p517, %p518
      %p520 = pneg %p519
      // Predicated region
      $region69: #{tpu_custom_call.1} parent=5 // pred_check
        _
      $region70: #{tpu_custom_call.1} parent=5 // pred_check_branch
        %522 = sbr.rel (%p519) target = $region72
      $region71: #{tpu_custom_call.1} parent=5 // pred_region
        %s523 = ssub.s32 %s36, 1
        %s524 = sand.u32 %s49, 1
        %s525 = scalar_lea.sflag [#allocation5], %s524
        %s526 = sand.u32 %s49, 1
        %s527 = smul.addr %s526, 8
        %s528 = scalar_lea.vmem [#allocation4], %s527
        // Predicated region
        $region73: #{tpu_custom_call.1} parent=71 // pred_check
          %p529 = pneg %p62
        $region74: #{tpu_custom_call.1} parent=71 // pred_check_branch
          %531 = sbr.rel (%p529) target = $region76
        $region75: #{tpu_custom_call.1} parent=71 // pred_region
          %532 = dma.done %s525, 128
        $region76: #{tpu_custom_call.1} parent=71 // pred_fallthru
          _
        // Predicated region
        $region77: #{tpu_custom_call.1} parent=71 // pred_check
          %p533 = pneg %p83
        $region78: #{tpu_custom_call.1} parent=71 // pred_check_branch
          %535 = sbr.rel (%p533) target = $region80
        $region79: #{tpu_custom_call.1} parent=71 // pred_region
          %536 = dma.done [#allocation8], 256
        $region80: #{tpu_custom_call.1} parent=71 // pred_fallthru
          _
        // Predicated region
        $region81: #{tpu_custom_call.1} parent=71 // pred_check
          %p537 = pneg %p104
        $region82: #{tpu_custom_call.1} parent=71 // pred_check_branch
          %539 = sbr.rel (%p537) target = $region84
        $region83: #{tpu_custom_call.1} parent=71 // pred_region
          %540 = dma.done [#allocation8], 16
        $region84: #{tpu_custom_call.1} parent=71 // pred_fallthru
          _
        // Predicated region
        $region85: #{tpu_custom_call.1} parent=71 // pred_check
          %p541 = pneg %p125
        $region86: #{tpu_custom_call.1} parent=71 // pred_check_branch
          %543 = sbr.rel (%p541) target = $region88
        $region87: #{tpu_custom_call.1} parent=71 // pred_region
          %544 = dma.done [#allocation11], 256
        $region88: #{tpu_custom_call.1} parent=71 // pred_fallthru
          _
        // Predicated region
        $region89: #{tpu_custom_call.1} parent=71 // pred_check
          %p545 = pneg %p146
        $region90: #{tpu_custom_call.1} parent=71 // pred_check_branch
          %547 = sbr.rel (%p545) target = $region92
        $region91: #{tpu_custom_call.1} parent=71 // pred_region
          %548 = dma.done [#allocation11], 16
        $region92: #{tpu_custom_call.1} parent=71 // pred_fallthru
          _
        // Predicated region
        $region93: #{tpu_custom_call.1} parent=71 // pred_check
          %p549 = pneg %p167
        $region94: #{tpu_custom_call.1} parent=71 // pred_check_branch
          %551 = sbr.rel (%p549) target = $region96
        $region95: #{tpu_custom_call.1} parent=71 // pred_region
          %552 = dma.done [#allocation14], 16
        $region96: #{tpu_custom_call.1} parent=71 // pred_fallthru
          _
        // Predicated region
        $region97: #{tpu_custom_call.1} parent=71 // pred_check
          %p553 = pneg %p188
        $region98: #{tpu_custom_call.1} parent=71 // pred_check_branch
          %555 = sbr.rel (%p553) target = $region100
        $region99: #{tpu_custom_call.1} parent=71 // pred_region
          %556 = dma.done [#allocation14], 16
        $region100: #{tpu_custom_call.1} parent=71 // pred_fallthru
          _
        // Predicated region
        $region101: #{tpu_custom_call.1} parent=71 // pred_check
          %p557 = pneg %p209
        $region102: #{tpu_custom_call.1} parent=71 // pred_check_branch
          %559 = sbr.rel (%p557) target = $region104
        $region103: #{tpu_custom_call.1} parent=71 // pred_region
          %560 = dma.done [#allocation17], 256
        $region104: #{tpu_custom_call.1} parent=71 // pred_fallthru
          _
        // Predicated region
        $region105: #{tpu_custom_call.1} parent=71 // pred_check
          %p561 = pneg %p230
        $region106: #{tpu_custom_call.1} parent=71 // pred_check_branch
          %563 = sbr.rel (%p561) target = $region108
        $region107: #{tpu_custom_call.1} parent=71 // pred_region
          %564 = dma.done [#allocation17], 16
        $region108: #{tpu_custom_call.1} parent=71 // pred_fallthru
          _
        // Predicated region
        $region109: #{tpu_custom_call.1} parent=71 // pred_check
          %p565 = pneg %p251
        $region110: #{tpu_custom_call.1} parent=71 // pred_check_branch
          %567 = sbr.rel (%p565) target = $region112
        $region111: #{tpu_custom_call.1} parent=71 // pred_region
          %568 = dma.done [#allocation20], 512
        $region112: #{tpu_custom_call.1} parent=71 // pred_fallthru
          _
        // Predicated region
        $region113: #{tpu_custom_call.1} parent=71 // pred_check
          %p569 = pneg %p272
        $region114: #{tpu_custom_call.1} parent=71 // pred_check_branch
          %571 = sbr.rel (%p569) target = $region116
        $region115: #{tpu_custom_call.1} parent=71 // pred_region
          %572 = dma.done [#allocation20], 16
        $region116: #{tpu_custom_call.1} parent=71 // pred_fallthru
          _
        // Predicated region
        $region117: #{tpu_custom_call.1} parent=71 // pred_check
          %p573 = pneg %p293
        $region118: #{tpu_custom_call.1} parent=71 // pred_check_branch
          %575 = sbr.rel (%p573) target = $region120
        $region119: #{tpu_custom_call.1} parent=71 // pred_region
          %576 = dma.done [#allocation23], 16
        $region120: #{tpu_custom_call.1} parent=71 // pred_fallthru
          _
        // Predicated region
        $region121: #{tpu_custom_call.1} parent=71 // pred_check
          %p577 = pneg %p314
        $region122: #{tpu_custom_call.1} parent=71 // pred_check_branch
          %579 = sbr.rel (%p577) target = $region124
        $region123: #{tpu_custom_call.1} parent=71 // pred_region
          %580 = dma.done [#allocation23], 16
        $region124: #{tpu_custom_call.1} parent=71 // pred_fallthru
          _
        %s581 = sand.u32 %s49, 1
        %s582 = scalar_lea.sflag [#allocation5], %s581
        %s583 = sand.u32 %s49, 1
        %s584 = smul.addr %s583, 8
        %s585 = scalar_lea.vmem [#allocation4], %s584
        %p586 = pneg %p62
        %p587 = pneg %p59
        %p588 = pneg %p83
        %p589 = pneg %p80
        %p590 = pneg %p104
        %p591 = pneg %p101
        %p592 = pneg %p125
        %p593 = pneg %p122
        %p594 = pneg %p146
        %p595 = pneg %p143
        %p596 = pneg %p167
        %p597 = pneg %p164
        %p598 = pneg %p188
        %p599 = pneg %p185
        %p600 = pneg %p209
        %p601 = pneg %p206
        %p602 = pneg %p230
        %p603 = pneg %p227
        %p604 = pneg %p251
        %p605 = pneg %p248
        %p606 = pneg %p272
        %p607 = pneg %p269
        %p608 = pneg %p293
        %p609 = pneg %p290
        %p610 = pneg %p314
        %p611 = pneg %p311
        %p612 = pneg %p340
        %p613 = pneg %p337
        %s614 = sand.u32 %s327, 1
        %s615 = scalar_lea.sflag [#allocation6], %s614
        %s616 = sand.u32 %s327, 1
        %s617 = smul.addr %s616, 8
        %s618 = scalar_lea.vmem [#allocation25], %s617
        %v620 = vld [vmem:[%s528] sm:$0xff]
        %v621 = vpack.c.bf16 %v620, %v620
        %v622 = vld [vmem:[#allocation7] sm:$0xf]
        %v623 = vld [vmem:[#allocation7 + $0x4] sm:$0xf]
        %v624 = vld [vmem:[#allocation7 + $0x8] sm:$0xf]
        %v625 = vld [vmem:[#allocation7 + $0xc] sm:$0xf]
        %v626 = vld [vmem:[#allocation9] sm:$0x1]
        %v628 = vlaneseq
        %v629 = vshrl.u32 %v628, 7
        %v630 = vsub.s32 0, %v629
        %v631 = vrot.slane %v626, %v630
        %v637 = vunpack.c.l.b16 %v622
        %v638 = vunpack.c.l.b16 %v623
        %v639 = vunpack.c.l.b16 %v624
        %v640 = vunpack.c.l.b16 %v625
        %v641 = vpack.c.b16 %v638, %v637
        %v642 = vpack.c.b16 %v640, %v639
        %vm645 = vcmask 261120
        %v647 = vsel %vm645, %v621, 0
        %649 = vmatprep.subr.bf16.mxu0 0
        %650 = vmatpush1.bf16.msra.mxu0 %v641
        %651 = vmatprep.subr.bf16.mxu0 0
        %652 = vmatpush1.bf16.msra.mxu0 %v642
        %653 = vmatprep.subr.bf16.mxu0 0
        %654 = vmatpush1.bf16.msra.mxu0 0
        %655 = vmatprep.subr.bf16.mxu0 0
        %656 = vmatpush1.bf16.msra.mxu0 0
        %657 = vmatprep.subr.bf16.mxu0 0
        %658 = vmatpush1.bf16.msra.mxu0 0
        %659 = vmatprep.subr.bf16.mxu0 0
        %660 = vmatpush1.bf16.msra.mxu0 0
        %661 = vmatprep.subr.bf16.mxu0 0
        %662 = vmatpush1.bf16.msra.mxu0 0
        %663 = vmatprep.subr.bf16.mxu0 0
        %664 = vmatpush1.bf16.msra.mxu0 0
        %665 = vmatprep.subr.bf16.mxu0 0
        %666 = vmatpush1.bf16.msra.mxu0 0
        %667 = vmatprep.subr.bf16.mxu0 0
        %668 = vmatpush1.bf16.msra.mxu0 0
        %669 = vmatprep.subr.bf16.mxu0 0
        %670 = vmatpush1.bf16.msra.mxu0 0
        %671 = vmatprep.subr.bf16.mxu0 0
        %672 = vmatpush1.bf16.msra.mxu0 0
        %673 = vmatprep.subr.bf16.mxu0 0
        %674 = vmatpush1.bf16.msra.mxu0 0
        %675 = vmatprep.subr.bf16.mxu0 0
        %676 = vmatpush1.bf16.msra.mxu0 0
        %677 = vmatprep.subr.bf16.mxu0 0
        %678 = vmatpush1.bf16.msra.mxu0 0
        %679 = vmatprep.subr.bf16.mxu0 0
        %680 = vmatpush1.bf16.msra.mxu0 0
        %681 = vmatprep.mubr.bf16.mxu0 0
        %682 = vmatmul.mubr.bf16.gmra.mrb[0].mxu0 %v647
        %v683 = vpop.f32.mrb[0].mxu0
        %v684 = vadd.f32 %v631, %v683
        %v685 = vpop.f32.mrb[0].mxu0
        %v686 = vpop.f32.mrb[0].mxu0
        %v687 = vpop.f32.mrb[0].mxu0
        %688 = vdwg.mxu0
        %690 = vrot.lane.b32.xlu0 %v684, 120
        %v691 = vpop.permute.xlu0 %690
        %693 = vrot.lane.b32.xlu0 %v684, 112
        %v694 = vpop.permute.xlu0 %693
        %696 = vrot.lane.b32.xlu0 %v684, 104
        %v697 = vpop.permute.xlu0 %696
        %v699 = vcombine.low %v684, %v694
        %v700 = vcombine.high %v684, %v694
        %v702 = vunpack.c.l.s4 1983009808
        %v703 = vunpack.c.0.s8 %v702
        %v704 = vlaneseq
        %v705 = vshrl.u32 %v704, 7
        %v706 = vsub.s32 %v703, %v705
        %v707 = vrot.slane %v699, %v706
        %v709 = vunpack.c.l.s4 1983009808
        %v710 = vunpack.c.0.s8 %v709
        %v711 = vlaneseq
        %v712 = vshrl.u32 %v711, 7
        %v713 = vsub.s32 %v710, %v712
        %v714 = vrot.slane %v700, %v713
        %v715 = vcombine.low %v691, %v697
        %v716 = vcombine.high %v691, %v697
        %v718 = vunpack.c.l.s4 1983009808
        %v719 = vunpack.c.0.s8 %v718
        %v720 = vlaneseq
        %v721 = vshrl.u32 %v720, 7
        %v722 = vsub.s32 %v719, %v721
        %v723 = vrot.slane %v715, %v722
        %v725 = vunpack.c.l.s4 1983009808
        %v726 = vunpack.c.0.s8 %v725
        %v727 = vlaneseq
        %v728 = vshrl.u32 %v727, 7
        %v729 = vsub.s32 %v726, %v728
        %v730 = vrot.slane %v716, %v729
        %v731 = vcombine.low %v707, %v723
        %v732 = vcombine.high %v707, %v723
        %v734 = vunpack.c.l.s4 1934713408
        %v735 = vunpack.c.0.s8 %v734
        %v736 = vlaneseq
        %v737 = vshrl.u32 %v736, 7
        %v738 = vsub.s32 %v735, %v737
        %v739 = vrot.slane %v731, %v738
        %v741 = vunpack.c.l.s4 1934713408
        %v742 = vunpack.c.0.s8 %v741
        %v743 = vlaneseq
        %v744 = vshrl.u32 %v743, 7
        %v745 = vsub.s32 %v742, %v744
        %v746 = vrot.slane %v732, %v745
        %v747 = vcombine.low %v714, %v730
        %v748 = vcombine.high %v714, %v730
        %v750 = vunpack.c.l.s4 1934713408
        %v751 = vunpack.c.0.s8 %v750
        %v752 = vlaneseq
        %v753 = vshrl.u32 %v752, 7
        %v754 = vsub.s32 %v751, %v753
        %v755 = vrot.slane %v747, %v754
        %v757 = vunpack.c.l.s4 1934713408
        %v758 = vunpack.c.0.s8 %v757
        %v759 = vlaneseq
        %v760 = vshrl.u32 %v759, 7
        %v761 = vsub.s32 %v758, %v760
        %v762 = vrot.slane %v748, %v761
        %v763 = vcombine.high %v739, 0.0
        %v764 = vcombine.high %v746, 0.0
        %v765 = vcombine.high %v755, 0.0
        %v766 = vcombine.high %v762, 0.0
        %v767 = vcombine.low %v739, %v746
        %v769 = vunpack.c.l.s4 1983009808
        %v770 = vunpack.c.0.s8 %v769
        %v771 = vlaneseq
        %v772 = vshrl.u32 %v771, 7
        %v773 = vsub.s32 %v770, %v772
        %v774 = vrot.slane %v767, %v773
        %v775 = vcombine.low %v763, %v764
        %v777 = vunpack.c.l.s4 1983009808
        %v778 = vunpack.c.0.s8 %v777
        %v779 = vlaneseq
        %v780 = vshrl.u32 %v779, 7
        %v781 = vsub.s32 %v778, %v780
        %v782 = vrot.slane %v775, %v781
        %v783 = vcombine.low %v755, %v762
        %v785 = vunpack.c.l.s4 1983009808
        %v786 = vunpack.c.0.s8 %v785
        %v787 = vlaneseq
        %v788 = vshrl.u32 %v787, 7
        %v789 = vsub.s32 %v786, %v788
        %v790 = vrot.slane %v783, %v789
        %v791 = vcombine.low %v765, %v766
        %v793 = vunpack.c.l.s4 1983009808
        %v794 = vunpack.c.0.s8 %v793
        %v795 = vlaneseq
        %v796 = vshrl.u32 %v795, 7
        %v797 = vsub.s32 %v794, %v796
        %v798 = vrot.slane %v791, %v797
        %v799 = vcombine.low %v774, %v782
        %v800 = vcombine.high %v774, %v782
        %v802 = vunpack.c.l.s4 1934713408
        %v803 = vunpack.c.0.s8 %v802
        %v804 = vlaneseq
        %v805 = vshrl.u32 %v804, 7
        %v806 = vsub.s32 %v803, %v805
        %v807 = vrot.slane %v799, %v806
        %v809 = vunpack.c.l.s4 1934713408
        %v810 = vunpack.c.0.s8 %v809
        %v811 = vlaneseq
        %v812 = vshrl.u32 %v811, 7
        %v813 = vsub.s32 %v810, %v812
        %v814 = vrot.slane %v800, %v813
        %v815 = vcombine.low %v790, %v798
        %v816 = vcombine.high %v790, %v798
        %v818 = vunpack.c.l.s4 1934713408
        %v819 = vunpack.c.0.s8 %v818
        %v820 = vlaneseq
        %v821 = vshrl.u32 %v820, 7
        %v822 = vsub.s32 %v819, %v821
        %v823 = vrot.slane %v815, %v822
        %v825 = vunpack.c.l.s4 1934713408
        %v826 = vunpack.c.0.s8 %v825
        %v827 = vlaneseq
        %v828 = vshrl.u32 %v827, 7
        %v829 = vsub.s32 %v826, %v828
        %v830 = vrot.slane %v816, %v829
        %v831 = vcombine.low %v807, %v823
        %v832 = vcombine.high %v807, %v823
        %v833 = vcombine.low %v814, %v830
        %v834 = vcombine.high %v814, %v830
        %v835 = vpack.c.bf16 %v831, %v831
        %v836 = vpack.c.bf16 %v832, %v832
        %v837 = vpack.c.bf16 %v833, %v833
        %v838 = vpack.c.bf16 %v834, %v834
        %839 = vrot.lane.b32.xlu0 %v684, 96
        %v840 = vpop.permute.xlu0 %839
        %841 = vrot.lane.b32.xlu0 %v691, 96
        %v842 = vpop.permute.xlu0 %841
        %843 = vrot.lane.b32.xlu0 %v694, 96
        %v844 = vpop.permute.xlu0 %843
        %845 = vrot.lane.b32.xlu0 %v697, 96
        %v846 = vpop.permute.xlu0 %845
        %v851 = vcombine.low %v840, %v844
        %v852 = vcombine.high %v840, %v844
        %v854 = vunpack.c.l.s4 1983009808
        %v855 = vunpack.c.0.s8 %v854
        %v856 = vlaneseq
        %v857 = vshrl.u32 %v856, 7
        %v858 = vsub.s32 %v855, %v857
        %v859 = vrot.slane %v851, %v858
        %v861 = vunpack.c.l.s4 1983009808
        %v862 = vunpack.c.0.s8 %v861
        %v863 = vlaneseq
        %v864 = vshrl.u32 %v863, 7
        %v865 = vsub.s32 %v862, %v864
        %v866 = vrot.slane %v852, %v865
        %v867 = vcombine.low %v842, %v846
        %v868 = vcombine.high %v842, %v846
        %v870 = vunpack.c.l.s4 1983009808
        %v871 = vunpack.c.0.s8 %v870
        %v872 = vlaneseq
        %v873 = vshrl.u32 %v872, 7
        %v874 = vsub.s32 %v871, %v873
        %v875 = vrot.slane %v867, %v874
        %v877 = vunpack.c.l.s4 1983009808
        %v878 = vunpack.c.0.s8 %v877
        %v879 = vlaneseq
        %v880 = vshrl.u32 %v879, 7
        %v881 = vsub.s32 %v878, %v880
        %v882 = vrot.slane %v868, %v881
        %v883 = vcombine.low %v859, %v875
        %v884 = vcombine.high %v859, %v875
        %v886 = vunpack.c.l.s4 1934713408
        %v887 = vunpack.c.0.s8 %v886
        %v888 = vlaneseq
        %v889 = vshrl.u32 %v888, 7
        %v890 = vsub.s32 %v887, %v889
        %v891 = vrot.slane %v883, %v890
        %v893 = vunpack.c.l.s4 1934713408
        %v894 = vunpack.c.0.s8 %v893
        %v895 = vlaneseq
        %v896 = vshrl.u32 %v895, 7
        %v897 = vsub.s32 %v894, %v896
        %v898 = vrot.slane %v884, %v897
        %v899 = vcombine.low %v866, %v882
        %v900 = vcombine.high %v866, %v882
        %v902 = vunpack.c.l.s4 1934713408
        %v903 = vunpack.c.0.s8 %v902
        %v904 = vlaneseq
        %v905 = vshrl.u32 %v904, 7
        %v906 = vsub.s32 %v903, %v905
        %v907 = vrot.slane %v899, %v906
        %v909 = vunpack.c.l.s4 1934713408
        %v910 = vunpack.c.0.s8 %v909
        %v911 = vlaneseq
        %v912 = vshrl.u32 %v911, 7
        %v913 = vsub.s32 %v910, %v912
        %v914 = vrot.slane %v900, %v913
        %v915 = vcombine.high %v891, 0.0
        %v916 = vcombine.high %v898, 0.0
        %v917 = vcombine.high %v907, 0.0
        %v918 = vcombine.high %v914, 0.0
        %v919 = vcombine.low %v891, %v898
        %v921 = vunpack.c.l.s4 1983009808
        %v922 = vunpack.c.0.s8 %v921
        %v923 = vlaneseq
        %v924 = vshrl.u32 %v923, 7
        %v925 = vsub.s32 %v922, %v924
        %v926 = vrot.slane %v919, %v925
        %v927 = vcombine.low %v915, %v916
        %v929 = vunpack.c.l.s4 1983009808
        %v930 = vunpack.c.0.s8 %v929
        %v931 = vlaneseq
        %v932 = vshrl.u32 %v931, 7
        %v933 = vsub.s32 %v930, %v932
        %v934 = vrot.slane %v927, %v933
        %v935 = vcombine.low %v907, %v914
        %v937 = vunpack.c.l.s4 1983009808
        %v938 = vunpack.c.0.s8 %v937
        %v939 = vlaneseq
        %v940 = vshrl.u32 %v939, 7
        %v941 = vsub.s32 %v938, %v940
        %v942 = vrot.slane %v935, %v941
        %v943 = vcombine.low %v917, %v918
        %v945 = vunpack.c.l.s4 1983009808
        %v946 = vunpack.c.0.s8 %v945
        %v947 = vlaneseq
        %v948 = vshrl.u32 %v947, 7
        %v949 = vsub.s32 %v946, %v948
        %v950 = vrot.slane %v943, %v949
        %v951 = vcombine.low %v926, %v934
        %v952 = vcombine.high %v926, %v934
        %v954 = vunpack.c.l.s4 1934713408
        %v955 = vunpack.c.0.s8 %v954
        %v956 = vlaneseq
        %v957 = vshrl.u32 %v956, 7
        %v958 = vsub.s32 %v955, %v957
        %v959 = vrot.slane %v951, %v958
        %v961 = vunpack.c.l.s4 1934713408
        %v962 = vunpack.c.0.s8 %v961
        %v963 = vlaneseq
        %v964 = vshrl.u32 %v963, 7
        %v965 = vsub.s32 %v962, %v964
        %v966 = vrot.slane %v952, %v965
        %v967 = vcombine.low %v942, %v950
        %v968 = vcombine.high %v942, %v950
        %v970 = vunpack.c.l.s4 1934713408
        %v971 = vunpack.c.0.s8 %v970
        %v972 = vlaneseq
        %v973 = vshrl.u32 %v972, 7
        %v974 = vsub.s32 %v971, %v973
        %v975 = vrot.slane %v967, %v974
        %v977 = vunpack.c.l.s4 1934713408
        %v978 = vunpack.c.0.s8 %v977
        %v979 = vlaneseq
        %v980 = vshrl.u32 %v979, 7
        %v981 = vsub.s32 %v978, %v980
        %v982 = vrot.slane %v968, %v981
        %v983 = vcombine.low %v959, %v975
        %v984 = vcombine.high %v959, %v975
        %v985 = vcombine.low %v966, %v982
        %v986 = vcombine.high %v966, %v982
        %v987 = vpack.c.bf16 %v983, %v983
        %v988 = vpack.c.bf16 %v984, %v984
        %v989 = vpack.c.bf16 %v985, %v985
        %v990 = vpack.c.bf16 %v986, %v986
        %991 = vrot.lane.b32.xlu0 %v684, 64
        %v992 = vpop.permute.xlu0 %991
        %993 = vrot.lane.b32.xlu0 %v691, 64
        %v994 = vpop.permute.xlu0 %993
        %995 = vrot.lane.b32.xlu0 %v694, 64
        %v996 = vpop.permute.xlu0 %995
        %997 = vrot.lane.b32.xlu0 %v697, 64
        %v998 = vpop.permute.xlu0 %997
        %v1003 = vcombine.low %v992, %v996
        %v1004 = vcombine.high %v992, %v996
        %v1006 = vunpack.c.l.s4 1983009808
        %v1007 = vunpack.c.0.s8 %v1006
        %v1008 = vlaneseq
        %v1009 = vshrl.u32 %v1008, 7
        %v1010 = vsub.s32 %v1007, %v1009
        %v1011 = vrot.slane %v1003, %v1010
        %v1013 = vunpack.c.l.s4 1983009808
        %v1014 = vunpack.c.0.s8 %v1013
        %v1015 = vlaneseq
        %v1016 = vshrl.u32 %v1015, 7
        %v1017 = vsub.s32 %v1014, %v1016
        %v1018 = vrot.slane %v1004, %v1017
        %v1019 = vcombine.low %v994, %v998
        %v1020 = vcombine.high %v994, %v998
        %v1022 = vunpack.c.l.s4 1983009808
        %v1023 = vunpack.c.0.s8 %v1022
        %v1024 = vlaneseq
        %v1025 = vshrl.u32 %v1024, 7
        %v1026 = vsub.s32 %v1023, %v1025
        %v1027 = vrot.slane %v1019, %v1026
        %v1029 = vunpack.c.l.s4 1983009808
        %v1030 = vunpack.c.0.s8 %v1029
        %v1031 = vlaneseq
        %v1032 = vshrl.u32 %v1031, 7
        %v1033 = vsub.s32 %v1030, %v1032
        %v1034 = vrot.slane %v1020, %v1033
        %v1035 = vcombine.low %v1011, %v1027
        %v1036 = vcombine.high %v1011, %v1027
        %v1038 = vunpack.c.l.s4 1934713408
        %v1039 = vunpack.c.0.s8 %v1038
        %v1040 = vlaneseq
        %v1041 = vshrl.u32 %v1040, 7
        %v1042 = vsub.s32 %v1039, %v1041
        %v1043 = vrot.slane %v1035, %v1042
        %v1045 = vunpack.c.l.s4 1934713408
        %v1046 = vunpack.c.0.s8 %v1045
        %v1047 = vlaneseq
        %v1048 = vshrl.u32 %v1047, 7
        %v1049 = vsub.s32 %v1046, %v1048
        %v1050 = vrot.slane %v1036, %v1049
        %v1051 = vcombine.low %v1018, %v1034
        %v1052 = vcombine.high %v1018, %v1034
        %v1054 = vunpack.c.l.s4 1934713408
        %v1055 = vunpack.c.0.s8 %v1054
        %v1056 = vlaneseq
        %v1057 = vshrl.u32 %v1056, 7
        %v1058 = vsub.s32 %v1055, %v1057
        %v1059 = vrot.slane %v1051, %v1058
        %v1061 = vunpack.c.l.s4 1934713408
        %v1062 = vunpack.c.0.s8 %v1061
        %v1063 = vlaneseq
        %v1064 = vshrl.u32 %v1063, 7
        %v1065 = vsub.s32 %v1062, %v1064
        %v1066 = vrot.slane %v1052, %v1065
        %v1067 = vcombine.high %v1043, 0.0
        %v1068 = vcombine.high %v1050, 0.0
        %v1069 = vcombine.high %v1059, 0.0
        %v1070 = vcombine.high %v1066, 0.0
        %v1071 = vcombine.low %v1043, %v1050
        %v1073 = vunpack.c.l.s4 1983009808
        %v1074 = vunpack.c.0.s8 %v1073
        %v1075 = vlaneseq
        %v1076 = vshrl.u32 %v1075, 7
        %v1077 = vsub.s32 %v1074, %v1076
        %v1078 = vrot.slane %v1071, %v1077
        %v1079 = vcombine.low %v1067, %v1068
        %v1081 = vunpack.c.l.s4 1983009808
        %v1082 = vunpack.c.0.s8 %v1081
        %v1083 = vlaneseq
        %v1084 = vshrl.u32 %v1083, 7
        %v1085 = vsub.s32 %v1082, %v1084
        %v1086 = vrot.slane %v1079, %v1085
        %v1087 = vcombine.low %v1059, %v1066
        %v1089 = vunpack.c.l.s4 1983009808
        %v1090 = vunpack.c.0.s8 %v1089
        %v1091 = vlaneseq
        %v1092 = vshrl.u32 %v1091, 7
        %v1093 = vsub.s32 %v1090, %v1092
        %v1094 = vrot.slane %v1087, %v1093
        %v1095 = vcombine.low %v1069, %v1070
        %v1097 = vunpack.c.l.s4 1983009808
        %v1098 = vunpack.c.0.s8 %v1097
        %v1099 = vlaneseq
        %v1100 = vshrl.u32 %v1099, 7
        %v1101 = vsub.s32 %v1098, %v1100
        %v1102 = vrot.slane %v1095, %v1101
        %v1103 = vcombine.low %v1078, %v1086
        %v1104 = vcombine.high %v1078, %v1086
        %v1106 = vunpack.c.l.s4 1934713408
        %v1107 = vunpack.c.0.s8 %v1106
        %v1108 = vlaneseq
        %v1109 = vshrl.u32 %v1108, 7
        %v1110 = vsub.s32 %v1107, %v1109
        %v1111 = vrot.slane %v1103, %v1110
        %v1113 = vunpack.c.l.s4 1934713408
        %v1114 = vunpack.c.0.s8 %v1113
        %v1115 = vlaneseq
        %v1116 = vshrl.u32 %v1115, 7
        %v1117 = vsub.s32 %v1114, %v1116
        %v1118 = vrot.slane %v1104, %v1117
        %v1119 = vcombine.low %v1094, %v1102
        %v1120 = vcombine.high %v1094, %v1102
        %v1122 = vunpack.c.l.s4 1934713408
        %v1123 = vunpack.c.0.s8 %v1122
        %v1124 = vlaneseq
        %v1125 = vshrl.u32 %v1124, 7
        %v1126 = vsub.s32 %v1123, %v1125
        %v1127 = vrot.slane %v1119, %v1126
        %v1129 = vunpack.c.l.s4 1934713408
        %v1130 = vunpack.c.0.s8 %v1129
        %v1131 = vlaneseq
        %v1132 = vshrl.u32 %v1131, 7
        %v1133 = vsub.s32 %v1130, %v1132
        %v1134 = vrot.slane %v1120, %v1133
        %v1135 = vcombine.low %v1111, %v1127
        %v1136 = vcombine.high %v1111, %v1127
        %v1137 = vcombine.low %v1118, %v1134
        %v1138 = vcombine.high %v1118, %v1134
        %v1139 = vpack.c.bf16 %v1135, %v1135
        %v1140 = vpack.c.bf16 %v1136, %v1136
        %v1141 = vpack.c.bf16 %v1137, %v1137
        %v1142 = vpack.c.bf16 %v1138, %v1138
        %s1143 = sld [smem:[#allocation3 + %s41]]
        %v1144 = vlaneseq
        %v1145 = vand.u32 %v1144, 127
        %v1146 = vstv %s1143
        %vm1147 = vcmp.lt.s32.totalorder %v1145, %v1146
        %v1148 = vsel %vm1147, 0.0, -1e+09
        %vm1149 = vcmask 64512
        %v1151 = vsel %vm1149, %v835, 0
        %v1154 = vsel %vm1149, %v987, 0
        %1156 = vmatprep.subr.bf16.mxu0 0
        %1157 = vmatpush1.bf16.xpose.msra.mxu0 %v1154
        %1158 = vmatprep.subr.bf16.mxu0 0
        %1159 = vmatpush1.bf16.xpose.msra.mxu0 0
        %1160 = vmatprep.subr.bf16.mxu0 0
        %1161 = vmatpush1.bf16.xpose.msra.mxu0 0
        %1162 = vmatprep.subr.bf16.mxu0 0
        %1163 = vmatpush1.bf16.xpose.msra.mxu0 0
        %1164 = vmatprep.subr.bf16.mxu0 0
        %1165 = vmatpush1.bf16.xpose.msra.mxu0 0
        %1166 = vmatprep.subr.bf16.mxu0 0
        %1167 = vmatpush1.bf16.xpose.msra.mxu0 0
        %1168 = vmatprep.subr.bf16.mxu0 0
        %1169 = vmatpush1.bf16.xpose.msra.mxu0 0
        %1170 = vmatprep.subr.bf16.mxu0 0
        %1171 = vmatpush1.bf16.xpose.msra.mxu0 0
        %1172 = vmatprep.subr.bf16.mxu0 0
        %1173 = vmatpush1.bf16.xpose.msra.mxu0 0
        %1174 = vmatprep.subr.bf16.mxu0 0
        %1175 = vmatpush1.bf16.xpose.msra.mxu0 0
        %1176 = vmatprep.subr.bf16.mxu0 0
        %1177 = vmatpush1.bf16.xpose.msra.mxu0 0
        %1178 = vmatprep.subr.bf16.mxu0 0
        %1179 = vmatpush1.bf16.xpose.msra.mxu0 0
        %1180 = vmatprep.subr.bf16.mxu0 0
        %1181 = vmatpush1.bf16.xpose.msra.mxu0 0
        %1182 = vmatprep.subr.bf16.mxu0 0
        %1183 = vmatpush1.bf16.xpose.msra.mxu0 0
        %1184 = vmatprep.subr.bf16.mxu0 0
        %1185 = vmatpush1.bf16.xpose.msra.mxu0 0
        %1186 = vmatprep.subr.bf16.mxu0 0
        %1187 = vmatpush1.bf16.xpose.msra.mxu0 0
        %1188 = vmatprep.mubr.bf16.mxu0 0
        %1189 = vmatmul.mubr.bf16.gmra.mrb[0].mxu0 %v1151
        %v1190 = vpop.f32.mrb[0].mxu0
        %v1191 = vadd.f32 %v1148, %v1190
        %v1192 = vpop.f32.mrb[0].mxu0
        %v1193 = vpop.f32.mrb[0].mxu0
        %v1194 = vpop.f32.mrb[0].mxu0
        %1195 = vdwg.mxu0
        %v1197 = vsel %vm1149, %v836, 0
        %v1200 = vsel %vm1149, %v988, 0
        %1202 = vmatprep.subr.bf16.mxu0 0
        %1203 = vmatpush1.bf16.xpose.msra.mxu0 %v1200
        %1204 = vmatprep.subr.bf16.mxu0 0
        %1205 = vmatpush1.bf16.xpose.msra.mxu0 0
        %1206 = vmatprep.subr.bf16.mxu0 0
        %1207 = vmatpush1.bf16.xpose.msra.mxu0 0
        %1208 = vmatprep.subr.bf16.mxu0 0
        %1209 = vmatpush1.bf16.xpose.msra.mxu0 0
        %1210 = vmatprep.subr.bf16.mxu0 0
        %1211 = vmatpush1.bf16.xpose.msra.mxu0 0
        %1212 = vmatprep.subr.bf16.mxu0 0
        %1213 = vmatpush1.bf16.xpose.msra.mxu0 0
        %1214 = vmatprep.subr.bf16.mxu0 0
        %1215 = vmatpush1.bf16.xpose.msra.mxu0 0
        %1216 = vmatprep.subr.bf16.mxu0 0
        %1217 = vmatpush1.bf16.xpose.msra.mxu0 0
        %1218 = vmatprep.subr.bf16.mxu0 0
        %1219 = vmatpush1.bf16.xpose.msra.mxu0 0
        %1220 = vmatprep.subr.bf16.mxu0 0
        %1221 = vmatpush1.bf16.xpose.msra.mxu0 0
        %1222 = vmatprep.subr.bf16.mxu0 0
        %1223 = vmatpush1.bf16.xpose.msra.mxu0 0
        %1224 = vmatprep.subr.bf16.mxu0 0
        %1225 = vmatpush1.bf16.xpose.msra.mxu0 0
        %1226 = vmatprep.subr.bf16.mxu0 0
        %1227 = vmatpush1.bf16.xpose.msra.mxu0 0
        %1228 = vmatprep.subr.bf16.mxu0 0
        %1229 = vmatpush1.bf16.xpose.msra.mxu0 0
        %1230 = vmatprep.subr.bf16.mxu0 0
        %1231 = vmatpush1.bf16.xpose.msra.mxu0 0
        %1232 = vmatprep.subr.bf16.mxu0 0
        %1233 = vmatpush1.bf16.xpose.msra.mxu0 0
        %1234 = vmatprep.mubr.bf16.mxu0 0
        %1235 = vmatmul.mubr.bf16.gmra.mrb[0].mxu0 %v1197
        %v1236 = vpop.f32.mrb[0].mxu0
        %v1237 = vadd.f32 %v1148, %v1236
        %v1238 = vpop.f32.mrb[0].mxu0
        %v1239 = vpop.f32.mrb[0].mxu0
        %v1240 = vpop.f32.mrb[0].mxu0
        %1241 = vdwg.mxu0
        %v1243 = vsel %vm1149, %v837, 0
        %v1246 = vsel %vm1149, %v989, 0
        %1248 = vmatprep.subr.bf16.mxu0 0
        %1249 = vmatpush1.bf16.xpose.msra.mxu0 %v1246
        %1250 = vmatprep.subr.bf16.mxu0 0
        %1251 = vmatpush1.bf16.xpose.msra.mxu0 0
        %1252 = vmatprep.subr.bf16.mxu0 0
        %1253 = vmatpush1.bf16.xpose.msra.mxu0 0
        %1254 = vmatprep.subr.bf16.mxu0 0
        %1255 = vmatpush1.bf16.xpose.msra.mxu0 0
        %1256 = vmatprep.subr.bf16.mxu0 0
        %1257 = vmatpush1.bf16.xpose.msra.mxu0 0
        %1258 = vmatprep.subr.bf16.mxu0 0
        %1259 = vmatpush1.bf16.xpose.msra.mxu0 0
        %1260 = vmatprep.subr.bf16.mxu0 0
        %1261 = vmatpush1.bf16.xpose.msra.mxu0 0
        %1262 = vmatprep.subr.bf16.mxu0 0
        %1263 = vmatpush1.bf16.xpose.msra.mxu0 0
        %1264 = vmatprep.subr.bf16.mxu0 0
        %1265 = vmatpush1.bf16.xpose.msra.mxu0 0
        %1266 = vmatprep.subr.bf16.mxu0 0
        %1267 = vmatpush1.bf16.xpose.msra.mxu0 0
        %1268 = vmatprep.subr.bf16.mxu0 0
        %1269 = vmatpush1.bf16.xpose.msra.mxu0 0
        %1270 = vmatprep.subr.bf16.mxu0 0
        %1271 = vmatpush1.bf16.xpose.msra.mxu0 0
        %1272 = vmatprep.subr.bf16.mxu0 0
        %1273 = vmatpush1.bf16.xpose.msra.mxu0 0
        %1274 = vmatprep.subr.bf16.mxu0 0
        %1275 = vmatpush1.bf16.xpose.msra.mxu0 0
        %1276 = vmatprep.subr.bf16.mxu0 0
        %1277 = vmatpush1.bf16.xpose.msra.mxu0 0
        %1278 = vmatprep.subr.bf16.mxu0 0
        %1279 = vmatpush1.bf16.xpose.msra.mxu0 0
        %1280 = vmatprep.mubr.bf16.mxu0 0
        %1281 = vmatmul.mubr.bf16.gmra.mrb[0].mxu0 %v1243
        %v1282 = vpop.f32.mrb[0].mxu0
        %v1283 = vadd.f32 %v1148, %v1282
        %v1284 = vpop.f32.mrb[0].mxu0
        %v1285 = vpop.f32.mrb[0].mxu0
        %v1286 = vpop.f32.mrb[0].mxu0
        %1287 = vdwg.mxu0
        %v1289 = vsel %vm1149, %v838, 0
        %v1292 = vsel %vm1149, %v990, 0
        %1294 = vmatprep.subr.bf16.mxu0 0
        %1295 = vmatpush1.bf16.xpose.msra.mxu0 %v1292
        %1296 = vmatprep.subr.bf16.mxu0 0
        %1297 = vmatpush1.bf16.xpose.msra.mxu0 0
        %1298 = vmatprep.subr.bf16.mxu0 0
        %1299 = vmatpush1.bf16.xpose.msra.mxu0 0
        %1300 = vmatprep.subr.bf16.mxu0 0
        %1301 = vmatpush1.bf16.xpose.msra.mxu0 0
        %1302 = vmatprep.subr.bf16.mxu0 0
        %1303 = vmatpush1.bf16.xpose.msra.mxu0 0
        %1304 = vmatprep.subr.bf16.mxu0 0
        %1305 = vmatpush1.bf16.xpose.msra.mxu0 0
        %1306 = vmatprep.subr.bf16.mxu0 0
        %1307 = vmatpush1.bf16.xpose.msra.mxu0 0
        %1308 = vmatprep.subr.bf16.mxu0 0
        %1309 = vmatpush1.bf16.xpose.msra.mxu0 0
        %1310 = vmatprep.subr.bf16.mxu0 0
        %1311 = vmatpush1.bf16.xpose.msra.mxu0 0
        %1312 = vmatprep.subr.bf16.mxu0 0
        %1313 = vmatpush1.bf16.xpose.msra.mxu0 0
        %1314 = vmatprep.subr.bf16.mxu0 0
        %1315 = vmatpush1.bf16.xpose.msra.mxu0 0
        %1316 = vmatprep.subr.bf16.mxu0 0
        %1317 = vmatpush1.bf16.xpose.msra.mxu0 0
        %1318 = vmatprep.subr.bf16.mxu0 0
        %1319 = vmatpush1.bf16.xpose.msra.mxu0 0
        %1320 = vmatprep.subr.bf16.mxu0 0
        %1321 = vmatpush1.bf16.xpose.msra.mxu0 0
        %1322 = vmatprep.subr.bf16.mxu0 0
        %1323 = vmatpush1.bf16.xpose.msra.mxu0 0
        %1324 = vmatprep.subr.bf16.mxu0 0
        %1325 = vmatpush1.bf16.xpose.msra.mxu0 0
        %1326 = vmatprep.mubr.bf16.mxu0 0
        %1327 = vmatmul.mubr.bf16.gmra.mrb[0].mxu0 %v1289
        %v1328 = vpop.f32.mrb[0].mxu0
        %v1329 = vadd.f32 %v1148, %v1328
        %v1330 = vpop.f32.mrb[0].mxu0
        %v1331 = vpop.f32.mrb[0].mxu0
        %v1332 = vpop.f32.mrb[0].mxu0
        %1333 = vdwg.mxu0
        %v1334 = vsel %vm1149, %v1191, -inf
        %1335 = vmax.xlane.f32.xlu0 %v1334
        %v1336 = vpop.xlane.xlu0 %1335
        %v1337 = vsel %vm1149, %v1237, -inf
        %1338 = vmax.xlane.f32.xlu0 %v1337
        %v1339 = vpop.xlane.xlu0 %1338
        %v1340 = vsel %vm1149, %v1283, -inf
        %1341 = vmax.xlane.f32.xlu0 %v1340
        %v1342 = vpop.xlane.xlu0 %1341
        %v1343 = vsel %vm1149, %v1329, -inf
        %1344 = vmax.xlane.f32.xlu0 %v1343
        %v1345 = vpop.xlane.xlu0 %1344
        %v1346 = vsub.f32 %v1191, %v1336
        %v1347 = vsub.f32 %v1237, %v1339
        %v1348 = vsub.f32 %v1283, %v1342
        %v1349 = vsub.f32 %v1329, %v1345
        %v1350 = vmul.f32 %v1346, 1.442695
        %v1351 = vpow.pop %v1350
        %v1352 = vmul.f32 %v1347, 1.442695
        %v1353 = vpow.pop %v1352
        %v1354 = vmul.f32 %v1348, 1.442695
        %v1355 = vpow.pop %v1354
        %v1356 = vmul.f32 %v1349, 1.442695
        %v1357 = vpow.pop %v1356
        %v1358 = vsel %vm1149, %v1351, 0.0
        %1359 = vadd.xlane.f32.xlu0 %v1358
        %v1360 = vpop.xlane.xlu0 %1359
        %v1361 = vsel %vm1149, %v1353, 0.0
        %1362 = vadd.xlane.f32.xlu0 %v1361
        %v1363 = vpop.xlane.xlu0 %1362
        %v1364 = vsel %vm1149, %v1355, 0.0
        %1365 = vadd.xlane.f32.xlu0 %v1364
        %v1366 = vpop.xlane.xlu0 %1365
        %v1367 = vsel %vm1149, %v1357, 0.0
        %1368 = vadd.xlane.f32.xlu0 %v1367
        %v1369 = vpop.xlane.xlu0 %1368
        %v1370 = vrcp.pop %v1360
        %v1371 = vrcp.pop %v1363
        %v1372 = vrcp.pop %v1366
        %v1373 = vrcp.pop %v1369
        %v1374 = vmul.f32 %v1351, %v1370
        %v1375 = vmul.f32 %v1353, %v1371
        %v1376 = vmul.f32 %v1355, %v1372
        %v1377 = vmul.f32 %v1357, %v1373
        %v1378 = vpack.c.bf16 %v1374, %v1374
        %v1379 = vpack.c.bf16 %v1375, %v1375
        %v1380 = vpack.c.bf16 %v1376, %v1376
        %v1381 = vpack.c.bf16 %v1377, %v1377
        %v1383 = vsel %vm1149, %v1378, 0
        %vm1385 = vcmask 1043456
        %v1387 = vsel %vm1385, %v1139, 0
        %1389 = vmatprep.subr.bf16.mxu0 0
        %1390 = vmatpush1.bf16.msra.mxu0 %v1387
        %1391 = vmatprep.subr.bf16.mxu0 0
        %1392 = vmatpush1.bf16.msra.mxu0 0
        %1393 = vmatprep.subr.bf16.mxu0 0
        %1394 = vmatpush1.bf16.msra.mxu0 0
        %1395 = vmatprep.subr.bf16.mxu0 0
        %1396 = vmatpush1.bf16.msra.mxu0 0
        %1397 = vmatprep.subr.bf16.mxu0 0
        %1398 = vmatpush1.bf16.msra.mxu0 0
        %1399 = vmatprep.subr.bf16.mxu0 0
        %1400 = vmatpush1.bf16.msra.mxu0 0
        %1401 = vmatprep.subr.bf16.mxu0 0
        %1402 = vmatpush1.bf16.msra.mxu0 0
        %1403 = vmatprep.subr.bf16.mxu0 0
        %1404 = vmatpush1.bf16.msra.mxu0 0
        %1405 = vmatprep.subr.bf16.mxu0 0
        %1406 = vmatpush1.bf16.msra.mxu0 0
        %1407 = vmatprep.subr.bf16.mxu0 0
        %1408 = vmatpush1.bf16.msra.mxu0 0
        %1409 = vmatprep.subr.bf16.mxu0 0
        %1410 = vmatpush1.bf16.msra.mxu0 0
        %1411 = vmatprep.subr.bf16.mxu0 0
        %1412 = vmatpush1.bf16.msra.mxu0 0
        %1413 = vmatprep.subr.bf16.mxu0 0
        %1414 = vmatpush1.bf16.msra.mxu0 0
        %1415 = vmatprep.subr.bf16.mxu0 0
        %1416 = vmatpush1.bf16.msra.mxu0 0
        %1417 = vmatprep.subr.bf16.mxu0 0
        %1418 = vmatpush1.bf16.msra.mxu0 0
        %1419 = vmatprep.subr.bf16.mxu0 0
        %1420 = vmatpush1.bf16.msra.mxu0 0
        %1421 = vmatprep.mubr.bf16.mxu0 0
        %1422 = vmatmul.mubr.bf16.gmra.mrb[0].mxu0 %v1383
        %v1423 = vpop.f32.mrb[0].mxu0
        %v1424 = vadd.f32 0.0, %v1423
        %v1425 = vpop.f32.mrb[0].mxu0
        %v1426 = vpop.f32.mrb[0].mxu0
        %v1427 = vpop.f32.mrb[0].mxu0
        %1428 = vdwg.mxu0
        %v1430 = vsel %vm1149, %v1379, 0
        %v1433 = vsel %vm1385, %v1140, 0
        %1435 = vmatprep.subr.bf16.mxu0 0
        %1436 = vmatpush1.bf16.msra.mxu0 %v1433
        %1437 = vmatprep.subr.bf16.mxu0 0
        %1438 = vmatpush1.bf16.msra.mxu0 0
        %1439 = vmatprep.subr.bf16.mxu0 0
        %1440 = vmatpush1.bf16.msra.mxu0 0
        %1441 = vmatprep.subr.bf16.mxu0 0
        %1442 = vmatpush1.bf16.msra.mxu0 0
        %1443 = vmatprep.subr.bf16.mxu0 0
        %1444 = vmatpush1.bf16.msra.mxu0 0
        %1445 = vmatprep.subr.bf16.mxu0 0
        %1446 = vmatpush1.bf16.msra.mxu0 0
        %1447 = vmatprep.subr.bf16.mxu0 0
        %1448 = vmatpush1.bf16.msra.mxu0 0
        %1449 = vmatprep.subr.bf16.mxu0 0
        %1450 = vmatpush1.bf16.msra.mxu0 0
        %1451 = vmatprep.subr.bf16.mxu0 0
        %1452 = vmatpush1.bf16.msra.mxu0 0
        %1453 = vmatprep.subr.bf16.mxu0 0
        %1454 = vmatpush1.bf16.msra.mxu0 0
        %1455 = vmatprep.subr.bf16.mxu0 0
        %1456 = vmatpush1.bf16.msra.mxu0 0
        %1457 = vmatprep.subr.bf16.mxu0 0
        %1458 = vmatpush1.bf16.msra.mxu0 0
        %1459 = vmatprep.subr.bf16.mxu0 0
        %1460 = vmatpush1.bf16.msra.mxu0 0
        %1461 = vmatprep.subr.bf16.mxu0 0
        %1462 = vmatpush1.bf16.msra.mxu0 0
        %1463 = vmatprep.subr.bf16.mxu0 0
        %1464 = vmatpush1.bf16.msra.mxu0 0
        %1465 = vmatprep.subr.bf16.mxu0 0
        %1466 = vmatpush1.bf16.msra.mxu0 0
        %1467 = vmatprep.mubr.bf16.mxu0 0
        %1468 = vmatmul.mubr.bf16.gmra.mrb[0].mxu0 %v1430
        %v1469 = vpop.f32.mrb[0].mxu0
        %v1470 = vadd.f32 0.0, %v1469
        %v1471 = vpop.f32.mrb[0].mxu0
        %v1472 = vpop.f32.mrb[0].mxu0
        %v1473 = vpop.f32.mrb[0].mxu0
        %1474 = vdwg.mxu0
        %v1476 = vsel %vm1149, %v1380, 0
        %v1479 = vsel %vm1385, %v1141, 0
        %1481 = vmatprep.subr.bf16.mxu0 0
        %1482 = vmatpush1.bf16.msra.mxu0 %v1479
        %1483 = vmatprep.subr.bf16.mxu0 0
        %1484 = vmatpush1.bf16.msra.mxu0 0
        %1485 = vmatprep.subr.bf16.mxu0 0
        %1486 = vmatpush1.bf16.msra.mxu0 0
        %1487 = vmatprep.subr.bf16.mxu0 0
        %1488 = vmatpush1.bf16.msra.mxu0 0
        %1489 = vmatprep.subr.bf16.mxu0 0
        %1490 = vmatpush1.bf16.msra.mxu0 0
        %1491 = vmatprep.subr.bf16.mxu0 0
        %1492 = vmatpush1.bf16.msra.mxu0 0
        %1493 = vmatprep.subr.bf16.mxu0 0
        %1494 = vmatpush1.bf16.msra.mxu0 0
        %1495 = vmatprep.subr.bf16.mxu0 0
        %1496 = vmatpush1.bf16.msra.mxu0 0
        %1497 = vmatprep.subr.bf16.mxu0 0
        %1498 = vmatpush1.bf16.msra.mxu0 0
        %1499 = vmatprep.subr.bf16.mxu0 0
        %1500 = vmatpush1.bf16.msra.mxu0 0
        %1501 = vmatprep.subr.bf16.mxu0 0
        %1502 = vmatpush1.bf16.msra.mxu0 0
        %1503 = vmatprep.subr.bf16.mxu0 0
        %1504 = vmatpush1.bf16.msra.mxu0 0
        %1505 = vmatprep.subr.bf16.mxu0 0
        %1506 = vmatpush1.bf16.msra.mxu0 0
        %1507 = vmatprep.subr.bf16.mxu0 0
        %1508 = vmatpush1.bf16.msra.mxu0 0
        %1509 = vmatprep.subr.bf16.mxu0 0
        %1510 = vmatpush1.bf16.msra.mxu0 0
        %1511 = vmatprep.subr.bf16.mxu0 0
        %1512 = vmatpush1.bf16.msra.mxu0 0
        %1513 = vmatprep.mubr.bf16.mxu0 0
        %1514 = vmatmul.mubr.bf16.gmra.mrb[0].mxu0 %v1476
        %v1515 = vpop.f32.mrb[0].mxu0
        %v1516 = vadd.f32 0.0, %v1515
        %v1517 = vpop.f32.mrb[0].mxu0
        %v1518 = vpop.f32.mrb[0].mxu0
        %v1519 = vpop.f32.mrb[0].mxu0
        %1520 = vdwg.mxu0
        %v1522 = vsel %vm1149, %v1381, 0
        %v1525 = vsel %vm1385, %v1142, 0
        %1527 = vmatprep.subr.bf16.mxu0 0
        %1528 = vmatpush1.bf16.msra.mxu0 %v1525
        %1529 = vmatprep.subr.bf16.mxu0 0
        %1530 = vmatpush1.bf16.msra.mxu0 0
        %1531 = vmatprep.subr.bf16.mxu0 0
        %1532 = vmatpush1.bf16.msra.mxu0 0
        %1533 = vmatprep.subr.bf16.mxu0 0
        %1534 = vmatpush1.bf16.msra.mxu0 0
        %1535 = vmatprep.subr.bf16.mxu0 0
        %1536 = vmatpush1.bf16.msra.mxu0 0
        %1537 = vmatprep.subr.bf16.mxu0 0
        %1538 = vmatpush1.bf16.msra.mxu0 0
        %1539 = vmatprep.subr.bf16.mxu0 0
        %1540 = vmatpush1.bf16.msra.mxu0 0
        %1541 = vmatprep.subr.bf16.mxu0 0
        %1542 = vmatpush1.bf16.msra.mxu0 0
        %1543 = vmatprep.subr.bf16.mxu0 0
        %1544 = vmatpush1.bf16.msra.mxu0 0
        %1545 = vmatprep.subr.bf16.mxu0 0
        %1546 = vmatpush1.bf16.msra.mxu0 0
        %1547 = vmatprep.subr.bf16.mxu0 0
        %1548 = vmatpush1.bf16.msra.mxu0 0
        %1549 = vmatprep.subr.bf16.mxu0 0
        %1550 = vmatpush1.bf16.msra.mxu0 0
        %1551 = vmatprep.subr.bf16.mxu0 0
        %1552 = vmatpush1.bf16.msra.mxu0 0
        %1553 = vmatprep.subr.bf16.mxu0 0
        %1554 = vmatpush1.bf16.msra.mxu0 0
        %1555 = vmatprep.subr.bf16.mxu0 0
        %1556 = vmatpush1.bf16.msra.mxu0 0
        %1557 = vmatprep.subr.bf16.mxu0 0
        %1558 = vmatpush1.bf16.msra.mxu0 0
        %1559 = vmatprep.mubr.bf16.mxu0 0
        %1560 = vmatmul.mubr.bf16.gmra.mrb[0].mxu0 %v1522
        %v1561 = vpop.f32.mrb[0].mxu0
        %v1562 = vadd.f32 0.0, %v1561
        %v1563 = vpop.f32.mrb[0].mxu0
        %v1564 = vpop.f32.mrb[0].mxu0
        %v1565 = vpop.f32.mrb[0].mxu0
        %1566 = vdwg.mxu0
        %v1567 = vpack.c.bf16 %v1424, %v1424
        %v1568 = vld [vmem:[#allocation10] sm:$0xf]
        %v1569 = vpack.c.bf16 %v1470, %v1470
        %s1570 = scalar_lea.vmem [#allocation10], 4
        %v1571 = vld [vmem:[%s1570] sm:$0xf]
        %v1573 = vsel %vm1149, %v1569, 0
        %v1576 = vsel %vm1385, %v1571, 0
        %1578 = vmatprep.subr.bf16.mxu0 0
        %1579 = vmatpush1.bf16.msra.mxu0 %v1576
        %1580 = vmatprep.subr.bf16.mxu0 0
        %1581 = vmatpush1.bf16.msra.mxu0 0
        %1582 = vmatprep.subr.bf16.mxu0 0
        %1583 = vmatpush1.bf16.msra.mxu0 0
        %1584 = vmatprep.subr.bf16.mxu0 0
        %1585 = vmatpush1.bf16.msra.mxu0 0
        %1586 = vmatprep.subr.bf16.mxu0 0
        %1587 = vmatpush1.bf16.msra.mxu0 0
        %1588 = vmatprep.subr.bf16.mxu0 0
        %1589 = vmatpush1.bf16.msra.mxu0 0
        %1590 = vmatprep.subr.bf16.mxu0 0
        %1591 = vmatpush1.bf16.msra.mxu0 0
        %1592 = vmatprep.subr.bf16.mxu0 0
        %1593 = vmatpush1.bf16.msra.mxu0 0
        %1594 = vmatprep.subr.bf16.mxu0 0
        %1595 = vmatpush1.bf16.msra.mxu0 0
        %1596 = vmatprep.subr.bf16.mxu0 0
        %1597 = vmatpush1.bf16.msra.mxu0 0
        %1598 = vmatprep.subr.bf16.mxu0 0
        %1599 = vmatpush1.bf16.msra.mxu0 0
        %1600 = vmatprep.subr.bf16.mxu0 0
        %1601 = vmatpush1.bf16.msra.mxu0 0
        %1602 = vmatprep.subr.bf16.mxu0 0
        %1603 = vmatpush1.bf16.msra.mxu0 0
        %1604 = vmatprep.subr.bf16.mxu0 0
        %1605 = vmatpush1.bf16.msra.mxu0 0
        %1606 = vmatprep.subr.bf16.mxu0 0
        %1607 = vmatpush1.bf16.msra.mxu0 0
        %1608 = vmatprep.subr.bf16.mxu0 0
        %1609 = vmatpush1.bf16.msra.mxu0 0
        %1610 = vmatprep.mubr.bf16.mxu0 0
        %1611 = vmatmul.mubr.bf16.gmra.mrb[0].mxu0 %v1573
        %v1612 = vpop.f32.mrb[0].mxu0
        %v1613 = vadd.f32 0.0, %v1612
        %v1614 = vpop.f32.mrb[0].mxu0
        %v1615 = vpop.f32.mrb[0].mxu0
        %v1616 = vpop.f32.mrb[0].mxu0
        %1617 = vdwg.mxu0
        %v1619 = vsel %vm1149, %v1567, 0
        %v1622 = vsel %vm1385, %v1568, 0
        %1624 = vmatprep.subr.bf16.mxu0 0
        %1625 = vmatpush1.bf16.msra.mxu0 %v1622
        %1626 = vmatprep.subr.bf16.mxu0 0
        %1627 = vmatpush1.bf16.msra.mxu0 0
        %1628 = vmatprep.subr.bf16.mxu0 0
        %1629 = vmatpush1.bf16.msra.mxu0 0
        %1630 = vmatprep.subr.bf16.mxu0 0
        %1631 = vmatpush1.bf16.msra.mxu0 0
        %1632 = vmatprep.subr.bf16.mxu0 0
        %1633 = vmatpush1.bf16.msra.mxu0 0
        %1634 = vmatprep.subr.bf16.mxu0 0
        %1635 = vmatpush1.bf16.msra.mxu0 0
        %1636 = vmatprep.subr.bf16.mxu0 0
        %1637 = vmatpush1.bf16.msra.mxu0 0
        %1638 = vmatprep.subr.bf16.mxu0 0
        %1639 = vmatpush1.bf16.msra.mxu0 0
        %1640 = vmatprep.subr.bf16.mxu0 0
        %1641 = vmatpush1.bf16.msra.mxu0 0
        %1642 = vmatprep.subr.bf16.mxu0 0
        %1643 = vmatpush1.bf16.msra.mxu0 0
        %1644 = vmatprep.subr.bf16.mxu0 0
        %1645 = vmatpush1.bf16.msra.mxu0 0
        %1646 = vmatprep.subr.bf16.mxu0 0
        %1647 = vmatpush1.bf16.msra.mxu0 0
        %1648 = vmatprep.subr.bf16.mxu0 0
        %1649 = vmatpush1.bf16.msra.mxu0 0
        %1650 = vmatprep.subr.bf16.mxu0 0
        %1651 = vmatpush1.bf16.msra.mxu0 0
        %1652 = vmatprep.subr.bf16.mxu0 0
        %1653 = vmatpush1.bf16.msra.mxu0 0
        %1654 = vmatprep.subr.bf16.mxu0 0
        %1655 = vmatpush1.bf16.msra.mxu0 0
        %1656 = vmatprep.mubr.bf16.mxu0 0
        %1657 = vmatmul.mubr.bf16.gmra.mrb[0].mxu0 %v1619
        %v1658 = vpop.f32.mrb[0].mxu0
        %v1659 = vadd.f32 %v1613, %v1658
        %v1660 = vpop.f32.mrb[0].mxu0
        %v1661 = vpop.f32.mrb[0].mxu0
        %v1662 = vpop.f32.mrb[0].mxu0
        %1663 = vdwg.mxu0
        %v1664 = vpack.c.bf16 %v1516, %v1516
        %s1665 = scalar_lea.vmem [#allocation10], 8
        %v1666 = vld [vmem:[%s1665] sm:$0xf]
        %v1668 = vsel %vm1149, %v1664, 0
        %v1671 = vsel %vm1385, %v1666, 0
        %1673 = vmatprep.subr.bf16.mxu0 0
        %1674 = vmatpush1.bf16.msra.mxu0 %v1671
        %1675 = vmatprep.subr.bf16.mxu0 0
        %1676 = vmatpush1.bf16.msra.mxu0 0
        %1677 = vmatprep.subr.bf16.mxu0 0
        %1678 = vmatpush1.bf16.msra.mxu0 0
        %1679 = vmatprep.subr.bf16.mxu0 0
        %1680 = vmatpush1.bf16.msra.mxu0 0
        %1681 = vmatprep.subr.bf16.mxu0 0
        %1682 = vmatpush1.bf16.msra.mxu0 0
        %1683 = vmatprep.subr.bf16.mxu0 0
        %1684 = vmatpush1.bf16.msra.mxu0 0
        %1685 = vmatprep.subr.bf16.mxu0 0
        %1686 = vmatpush1.bf16.msra.mxu0 0
        %1687 = vmatprep.subr.bf16.mxu0 0
        %1688 = vmatpush1.bf16.msra.mxu0 0
        %1689 = vmatprep.subr.bf16.mxu0 0
        %1690 = vmatpush1.bf16.msra.mxu0 0
        %1691 = vmatprep.subr.bf16.mxu0 0
        %1692 = vmatpush1.bf16.msra.mxu0 0
        %1693 = vmatprep.subr.bf16.mxu0 0
        %1694 = vmatpush1.bf16.msra.mxu0 0
        %1695 = vmatprep.subr.bf16.mxu0 0
        %1696 = vmatpush1.bf16.msra.mxu0 0
        %1697 = vmatprep.subr.bf16.mxu0 0
        %1698 = vmatpush1.bf16.msra.mxu0 0
        %1699 = vmatprep.subr.bf16.mxu0 0
        %1700 = vmatpush1.bf16.msra.mxu0 0
        %1701 = vmatprep.subr.bf16.mxu0 0
        %1702 = vmatpush1.bf16.msra.mxu0 0
        %1703 = vmatprep.subr.bf16.mxu0 0
        %1704 = vmatpush1.bf16.msra.mxu0 0
        %1705 = vmatprep.mubr.bf16.mxu0 0
        %1706 = vmatmul.mubr.bf16.gmra.mrb[0].mxu0 %v1668
        %v1707 = vpop.f32.mrb[0].mxu0
        %v1708 = vadd.f32 0.0, %v1707
        %v1709 = vpop.f32.mrb[0].mxu0
        %v1710 = vpop.f32.mrb[0].mxu0
        %v1711 = vpop.f32.mrb[0].mxu0
        %1712 = vdwg.mxu0
        %v1713 = vadd.f32 %v1659, %v1708
        %v1714 = vpack.c.bf16 %v1562, %v1562
        %s1715 = scalar_lea.vmem [#allocation10], 12
        %v1716 = vld [vmem:[%s1715] sm:$0xf]
        %v1718 = vsel %vm1149, %v1714, 0
        %v1721 = vsel %vm1385, %v1716, 0
        %1723 = vmatprep.subr.bf16.mxu0 0
        %1724 = vmatpush1.bf16.msra.mxu0 %v1721
        %1725 = vmatprep.subr.bf16.mxu0 0
        %1726 = vmatpush1.bf16.msra.mxu0 0
        %1727 = vmatprep.subr.bf16.mxu0 0
        %1728 = vmatpush1.bf16.msra.mxu0 0
        %1729 = vmatprep.subr.bf16.mxu0 0
        %1730 = vmatpush1.bf16.msra.mxu0 0
        %1731 = vmatprep.subr.bf16.mxu0 0
        %1732 = vmatpush1.bf16.msra.mxu0 0
        %1733 = vmatprep.subr.bf16.mxu0 0
        %1734 = vmatpush1.bf16.msra.mxu0 0
        %1735 = vmatprep.subr.bf16.mxu0 0
        %1736 = vmatpush1.bf16.msra.mxu0 0
        %1737 = vmatprep.subr.bf16.mxu0 0
        %1738 = vmatpush1.bf16.msra.mxu0 0
        %1739 = vmatprep.subr.bf16.mxu0 0
        %1740 = vmatpush1.bf16.msra.mxu0 0
        %1741 = vmatprep.subr.bf16.mxu0 0
        %1742 = vmatpush1.bf16.msra.mxu0 0
        %1743 = vmatprep.subr.bf16.mxu0 0
        %1744 = vmatpush1.bf16.msra.mxu0 0
        %1745 = vmatprep.subr.bf16.mxu0 0
        %1746 = vmatpush1.bf16.msra.mxu0 0
        %1747 = vmatprep.subr.bf16.mxu0 0
        %1748 = vmatpush1.bf16.msra.mxu0 0
        %1749 = vmatprep.subr.bf16.mxu0 0
        %1750 = vmatpush1.bf16.msra.mxu0 0
        %1751 = vmatprep.subr.bf16.mxu0 0
        %1752 = vmatpush1.bf16.msra.mxu0 0
        %1753 = vmatprep.subr.bf16.mxu0 0
        %1754 = vmatpush1.bf16.msra.mxu0 0
        %1755 = vmatprep.mubr.bf16.mxu0 0
        %1756 = vmatmul.mubr.bf16.gmra.mrb[0].mxu0 %v1718
        %v1757 = vpop.f32.mrb[0].mxu0
        %v1758 = vadd.f32 0.0, %v1757
        %v1759 = vpop.f32.mrb[0].mxu0
        %v1760 = vpop.f32.mrb[0].mxu0
        %v1761 = vpop.f32.mrb[0].mxu0
        %1762 = vdwg.mxu0
        %v1763 = vadd.f32 %v1713, %v1758
        %v1764 = vld [vmem:[#allocation12] sm:$0x1]
        %v1766 = vlaneseq
        %v1767 = vshrl.u32 %v1766, 7
        %v1768 = vsub.s32 0, %v1767
        %v1769 = vrot.slane %v1764, %v1768
        %v1771 = vadd.f32 %v1763, %v1769
        %v1772 = vadd.f32 %v620, %v1771
        %v1773 = vld [vmem:[#allocation13] sm:$0x1]
        %v1774 = vld [vmem:[#allocation15] sm:$0x1]
        %v1775 = vsel %vm645, %v1772, 0.0
        %1776 = vadd.xlane.f32.xlu0 %v1775
        %v1777 = vpop.xlane.xlu0 %1776
        %v1778 = vrcp.pop 32.0
        %v1779 = vmul.f32 %v1777, %v1778
        %v1780 = vsub.f32 %v1772, %v1779
        %v1781 = vmul.f32 %v1780, %v1780
        %v1782 = vsel %vm645, %v1781, 0.0
        %1783 = vadd.xlane.f32.xlu0 %v1782
        %v1784 = vpop.xlane.xlu0 %1783
        %v1785 = vmul.f32 %v1784, %v1778
        %v1786 = vadd.f32 %v1785, 1e-05
        %v1787 = vrsqrt.pop %v1786
        %v1788 = vmul.f32 %v1780, %v1787
        %v1790 = vlaneseq
        %v1791 = vshrl.u32 %v1790, 7
        %v1792 = vsub.s32 0, %v1791
        %v1793 = vrot.slane %v1773, %v1792
        %v1795 = vmul.f32 %v1788, %v1793
        %v1797 = vlaneseq
        %v1798 = vshrl.u32 %v1797, 7
        %v1799 = vsub.s32 0, %v1798
        %v1800 = vrot.slane %v1774, %v1799
        %v1802 = vadd.f32 %v1795, %v1800
        %v1803 = vpack.c.bf16 %v1802, %v1802
        %v1804 = vld [vmem:[#allocation16] sm:$0xf]
        %v1805 = vld [vmem:[#allocation16 + $0x4] sm:$0xf]
        %v1806 = vld [vmem:[#allocation16 + $0x8] sm:$0xf]
        %v1807 = vld [vmem:[#allocation16 + $0xc] sm:$0xf]
        %v1808 = vld [vmem:[#allocation18] sm:$0x1]
        %v1810 = vlaneseq
        %v1811 = vshrl.u32 %v1810, 7
        %v1812 = vsub.s32 0, %v1811
        %v1813 = vrot.slane %v1808, %v1812
        %v1819 = vunpack.c.l.b16 %v1804
        %v1820 = vunpack.c.l.b16 %v1805
        %v1821 = vunpack.c.l.b16 %v1806
        %v1822 = vunpack.c.l.b16 %v1807
        %v1823 = vpack.c.b16 %v1820, %v1819
        %v1824 = vpack.c.b16 %v1822, %v1821
        %v1828 = vsel %vm645, %v1803, 0
        %1830 = vmatprep.subr.bf16.mxu0 0
        %1831 = vmatpush1.bf16.msra.mxu0 %v1823
        %1832 = vmatprep.subr.bf16.mxu0 0
        %1833 = vmatpush1.bf16.msra.mxu0 %v1824
        %1834 = vmatprep.subr.bf16.mxu0 0
        %1835 = vmatpush1.bf16.msra.mxu0 0
        %1836 = vmatprep.subr.bf16.mxu0 0
        %1837 = vmatpush1.bf16.msra.mxu0 0
        %1838 = vmatprep.subr.bf16.mxu0 0
        %1839 = vmatpush1.bf16.msra.mxu0 0
        %1840 = vmatprep.subr.bf16.mxu0 0
        %1841 = vmatpush1.bf16.msra.mxu0 0
        %1842 = vmatprep.subr.bf16.mxu0 0
        %1843 = vmatpush1.bf16.msra.mxu0 0
        %1844 = vmatprep.subr.bf16.mxu0 0
        %1845 = vmatpush1.bf16.msra.mxu0 0
        %1846 = vmatprep.subr.bf16.mxu0 0
        %1847 = vmatpush1.bf16.msra.mxu0 0
        %1848 = vmatprep.subr.bf16.mxu0 0
        %1849 = vmatpush1.bf16.msra.mxu0 0
        %1850 = vmatprep.subr.bf16.mxu0 0
        %1851 = vmatpush1.bf16.msra.mxu0 0
        %1852 = vmatprep.subr.bf16.mxu0 0
        %1853 = vmatpush1.bf16.msra.mxu0 0
        %1854 = vmatprep.subr.bf16.mxu0 0
        %1855 = vmatpush1.bf16.msra.mxu0 0
        %1856 = vmatprep.subr.bf16.mxu0 0
        %1857 = vmatpush1.bf16.msra.mxu0 0
        %1858 = vmatprep.subr.bf16.mxu0 0
        %1859 = vmatpush1.bf16.msra.mxu0 0
        %1860 = vmatprep.subr.bf16.mxu0 0
        %1861 = vmatpush1.bf16.msra.mxu0 0
        %1862 = vmatprep.mubr.bf16.mxu0 0
        %1863 = vmatmul.mubr.bf16.gmra.mrb[0].mxu0 %v1828
        %v1864 = vpop.f32.mrb[0].mxu0
        %v1865 = vadd.f32 %v1813, %v1864
        %v1866 = vpop.f32.mrb[0].mxu0
        %v1867 = vpop.f32.mrb[0].mxu0
        %v1868 = vpop.f32.mrb[0].mxu0
        %1869 = vdwg.mxu0
        %v1870 = vmax.f32 %v1865, 0.0
        %v1871 = vpack.c.bf16 %v1870, %v1870
        %v1872 = vld [vmem:[#allocation19] sm:$0xf]
        %v1873 = vld [vmem:[#allocation19 + $0x4] sm:$0xf]
        %v1874 = vld [vmem:[#allocation19 + $0x8] sm:$0xf]
        %v1875 = vld [vmem:[#allocation19 + $0xc] sm:$0xf]
        %v1876 = vld [vmem:[#allocation19 + $0x10] sm:$0xf]
        %v1877 = vld [vmem:[#allocation19 + $0x14] sm:$0xf]
        %v1878 = vld [vmem:[#allocation19 + $0x18] sm:$0xf]
        %v1879 = vld [vmem:[#allocation19 + $0x1c] sm:$0xf]
        %v1880 = vld [vmem:[#allocation21] sm:$0x1]
        %v1882 = vlaneseq
        %v1883 = vshrl.u32 %v1882, 7
        %v1884 = vsub.s32 0, %v1883
        %v1885 = vrot.slane %v1880, %v1884
        %v1895 = vunpack.c.l.b16 %v1872
        %v1896 = vunpack.c.l.b16 %v1873
        %v1897 = vunpack.c.l.b16 %v1874
        %v1898 = vunpack.c.l.b16 %v1875
        %v1899 = vunpack.c.l.b16 %v1876
        %v1900 = vunpack.c.l.b16 %v1877
        %v1901 = vunpack.c.l.b16 %v1878
        %v1902 = vunpack.c.l.b16 %v1879
        %v1903 = vpack.c.b16 %v1896, %v1895
        %v1904 = vpack.c.b16 %v1898, %v1897
        %v1905 = vpack.c.b16 %v1900, %v1899
        %v1906 = vpack.c.b16 %v1902, %v1901
        %vm1911 = vcmask 523264
        %v1913 = vsel %vm1911, %v1871, 0
        %1915 = vmatprep.subr.bf16.mxu0 0
        %1916 = vmatpush1.bf16.msra.mxu0 %v1903
        %1917 = vmatprep.subr.bf16.mxu0 0
        %1918 = vmatpush1.bf16.msra.mxu0 %v1904
        %1919 = vmatprep.subr.bf16.mxu0 0
        %1920 = vmatpush1.bf16.msra.mxu0 %v1905
        %1921 = vmatprep.subr.bf16.mxu0 0
        %1922 = vmatpush1.bf16.msra.mxu0 %v1906
        %1923 = vmatprep.subr.bf16.mxu0 0
        %1924 = vmatpush1.bf16.msra.mxu0 0
        %1925 = vmatprep.subr.bf16.mxu0 0
        %1926 = vmatpush1.bf16.msra.mxu0 0
        %1927 = vmatprep.subr.bf16.mxu0 0
        %1928 = vmatpush1.bf16.msra.mxu0 0
        %1929 = vmatprep.subr.bf16.mxu0 0
        %1930 = vmatpush1.bf16.msra.mxu0 0
        %1931 = vmatprep.subr.bf16.mxu0 0
        %1932 = vmatpush1.bf16.msra.mxu0 0
        %1933 = vmatprep.subr.bf16.mxu0 0
        %1934 = vmatpush1.bf16.msra.mxu0 0
        %1935 = vmatprep.subr.bf16.mxu0 0
        %1936 = vmatpush1.bf16.msra.mxu0 0
        %1937 = vmatprep.subr.bf16.mxu0 0
        %1938 = vmatpush1.bf16.msra.mxu0 0
        %1939 = vmatprep.subr.bf16.mxu0 0
        %1940 = vmatpush1.bf16.msra.mxu0 0
        %1941 = vmatprep.subr.bf16.mxu0 0
        %1942 = vmatpush1.bf16.msra.mxu0 0
        %1943 = vmatprep.subr.bf16.mxu0 0
        %1944 = vmatpush1.bf16.msra.mxu0 0
        %1945 = vmatprep.subr.bf16.mxu0 0
        %1946 = vmatpush1.bf16.msra.mxu0 0
        %1947 = vmatprep.mubr.bf16.mxu0 0
        %1948 = vmatmul.mubr.bf16.gmra.mrb[0].mxu0 %v1913
        %v1949 = vpop.f32.mrb[0].mxu0
        %v1950 = vadd.f32 %v1885, %v1949
        %v1951 = vpop.f32.mrb[0].mxu0
        %v1952 = vpop.f32.mrb[0].mxu0
        %v1953 = vpop.f32.mrb[0].mxu0
        %1954 = vdwg.mxu0
        %v1955 = vadd.f32 %v1950, %v1802
        %v1956 = vld [vmem:[#allocation22] sm:$0x1]
        %v1957 = vld [vmem:[#allocation24] sm:$0x1]
        %v1958 = vsel %vm645, %v1955, 0.0
        %1959 = vadd.xlane.f32.xlu0 %v1958
        %v1960 = vpop.xlane.xlu0 %1959
        %v1961 = vmul.f32 %v1960, %v1778
        %v1962 = vsub.f32 %v1955, %v1961
        %v1963 = vmul.f32 %v1962, %v1962
        %v1964 = vsel %vm645, %v1963, 0.0
        %1965 = vadd.xlane.f32.xlu0 %v1964
        %v1966 = vpop.xlane.xlu0 %1965
        %v1967 = vmul.f32 %v1966, %v1778
        %v1968 = vadd.f32 %v1967, 1e-05
        %v1969 = vrsqrt.pop %v1968
        %v1970 = vmul.f32 %v1962, %v1969
        %v1972 = vlaneseq
        %v1973 = vshrl.u32 %v1972, 7
        %v1974 = vsub.s32 0, %v1973
        %v1975 = vrot.slane %v1956, %v1974
        %v1977 = vmul.f32 %v1970, %v1975
        %v1979 = vlaneseq
        %v1980 = vshrl.u32 %v1979, 7
        %v1981 = vsub.s32 0, %v1980
        %v1982 = vrot.slane %v1957, %v1981
        %v1984 = vadd.f32 %v1977, %v1982
        %1985 = vst.msk [vmem:[%s618] sm:$0xff] %vm645, %v1984
        %s1986 = sand.u32 %s327, 1
        %s1987 = scalar_lea.sflag [#allocation6], %s1986
        %s1988 = sand.u32 %s327, 1
        %s1989 = smul.addr %s1988, 8
        %s1990 = scalar_lea.vmem [#allocation25], %s1989
        // Predicated region
        $region125: #{tpu_custom_call.1} parent=71 // pred_check
          %p1991 = pneg %p337
        $region126: #{tpu_custom_call.1} parent=71 // pred_check_branch
          %1993 = sbr.rel (%p1991) target = $region128
        $region127: #{tpu_custom_call.1} parent=71 // pred_region
          %s1995 = ssub.s32 128, 128
          %1996 = vsyncadd %s1987, %s1995
          %s1997 = smul.addr %s41, 128
          %s1998 = scalar_lea.hbm %s14, %s1997
          %s2000 = sshll.u32 %s1990, 4
          %s2001 = int_to_ptr.vmem [resolvable:$true] %s2000
          %2003 = dma.vmem_to_hbm [thread:$0]  %s2001, 128, %s1998, %s1987
        $region128: #{tpu_custom_call.1} parent=71 // pred_fallthru
          _
      $region72: #{tpu_custom_call.1} parent=5 // pred_fallthru
        _
      %p2004 = scmp.le.s32.totalorder 2, %s36
      // Predicated region
      $region129: #{tpu_custom_call.1} parent=5 // pred_check
        %p2005 = pneg %p2004
      $region130: #{tpu_custom_call.1} parent=5 // pred_check_branch
        %2007 = sbr.rel (%p2005) target = $region132
      $region131: #{tpu_custom_call.1} parent=5 // pred_region
        %s2008 = ssub.s32 %s36, 2
        // Predicated region
        $region133: #{tpu_custom_call.1} parent=131 // pred_check
          %p2009 = pneg %p343
        $region134: #{tpu_custom_call.1} parent=131 // pred_check_branch
          %2011 = sbr.rel (%p2009) target = $region136
        $region135: #{tpu_custom_call.1} parent=131 // pred_region
          %s2012 = sand.u32 %s328, 1
          %s2013 = scalar_lea.sflag [#allocation6], %s2012
          %s2014 = sand.u32 %s328, 1
          %s2015 = smul.addr %s2014, 8
          %s2016 = scalar_lea.vmem [#allocation25], %s2015
          %2017 = dma.done %s2013, 128
        $region136: #{tpu_custom_call.1} parent=131 // pred_fallthru
          _
      $region132: #{tpu_custom_call.1} parent=5 // pred_fallthru
        _
    $region6: #{tpu_custom_call.1} parent=1 // loop_footer
      %s40 = sadd.s32 1, %s36
    $region7: #{tpu_custom_call.1} parent=1 // loop_footer_branch
      %35 = sbr.rel target = $region3
    $region8: #{tpu_custom_call.1} parent=1 // loop_exit
      _
    %2018 = vsyncpa [#allocation5], 1
    %s2019 = scalar_lea.sflag [#allocation5], 1
    %2020 = vsyncpa %s2019, 1
    %2021 = vsyncpa [#allocation8], 1
    %2022 = vsyncpa [#allocation11], 1
    %2023 = vsyncpa [#allocation14], 1
    %2024 = vsyncpa [#allocation17], 1
    %2025 = vsyncpa [#allocation20], 1
    %2026 = vsyncpa [#allocation23], 1
    %2027 = vsyncpa [#allocation6], 1
    %s2028 = scalar_lea.sflag [#allocation6], 1
    %2029 = vsyncpa %s2028, 1

</llo_original>
